<compile_context>
chip_gen: v5e
topology: v5e:2x2
jax: 0.10.0
libtpu: 0.0.40
codegen_flags: <defaults>
</compile_context>

<pallas_src>
import jax
import jax.numpy as jnp
from jax.experimental import pallas as pl
from jax.experimental.pallas import tpu as pltpu

# ---------------- small deterministic config ----------------
B = 2             # batch
S = 8             # sequence length
H = 32            # hidden_size
NH = 2            # attention heads
HD = H // NH      # head dim
I = 64            # FFN intermediate size
L = 8             # num_labels
HL = H + L        # span-head concat width
VOCAB = 100
NUM_LAYERS = 2
LN_EPS = 1e-12    # BERT LayerNorm eps
BS = B * S        # flattened token count
PADL = 128        # lane-dense logits width (sliced back to L in the wrapper)


def _layernorm(x, gamma, beta, eps=LN_EPS):
    mu = jnp.mean(x, axis=-1, keepdims=True)
    var = jnp.mean((x - mu) ** 2, axis=-1, keepdims=True)
    return (x - mu) * jax.lax.rsqrt(var + eps) * gamma + beta


def _softmax_last(x):
    # max-subtracted softmax; the divide goes to the EUP via approx reciprocal.
    m = jnp.max(x, axis=-1, keepdims=True)
    e = jnp.exp(x - m)
    return e * pl.reciprocal(jnp.sum(e, axis=-1, keepdims=True), approx=True)


# ---------------- fused forward kernel ----------------
def _fused_forward_kernel(emb_ref, bias_ref, eln_ref,
                          qkvw_ref, qkvb_ref, ow_ref, w1_ref, b1_ref, w2_ref,
                          hv_ref,
                          sw_ref, sb_ref, d0w_ref, hl_ref, d1w_ref, d1b_ref,
                          start_ref, end_ref):
    x = emb_ref[...]                       # (BS, H) flattened batch*seq
    bias = bias_ref[...]                   # (BS, BS) block-diag additive attn bias
    eln = eln_ref[...]                     # (2, H): [gamma, beta]
    x = _layernorm(x, eln[0:1], eln[1:2])

    # ------- transformer layers (static unroll) -------
    for l in range(NUM_LAYERS):
        qkvw = qkvw_ref[l]                 # (H, 3H) [in,out], 1/sqrt(HD) folded into Q
        qkvb = qkvb_ref[l]                 # (1, 3H)
        ow   = ow_ref[l]                   # (H, H)
        w1   = w1_ref[l]                   # (H, I)
        b1   = b1_ref[l]                   # (1, I)
        w2   = w2_ref[l]                   # (I, H)
        hv   = hv_ref[l]                   # (6, H): ob, ln1g, ln1b, b2, ln2g, ln2b
        ob, ln1g, ln1b = hv[0:1], hv[1:2], hv[2:3]
        b2, ln2g, ln2b = hv[3:4], hv[4:5], hv[5:6]

        qkv = jnp.dot(x, qkvw, preferred_element_type=jnp.float32) + qkvb
        q, k, v = qkv[:, 0:H], qkv[:, H:2 * H], qkv[:, 2 * H:3 * H]

        ctx_heads = []
        for h in range(NH):                # static unroll over heads
            sl = slice(h * HD, (h + 1) * HD)
            qh, kh, vh = q[:, sl], k[:, sl], v[:, sl]
            # q @ k^T without an explicit .T (NT dot_general)
            s = jax.lax.dot_general(qh, kh, (((1,), (1,)), ((), ())),
                                    preferred_element_type=jnp.float32) + bias
            p = _softmax_last(s)
            ctx_heads.append(jnp.dot(p, vh, preferred_element_type=jnp.float32))
        ctx = jnp.concatenate(ctx_heads, axis=-1)          # (BS, H)

        attn_out = jnp.dot(ctx, ow, preferred_element_type=jnp.float32) + ob
        x1 = _layernorm(x + attn_out, ln1g, ln1b)

        ffn = jnp.dot(x1, w1, preferred_element_type=jnp.float32) + b1
        # TODO(synk): exact erf-GELU (HF BERT) approximated with tanh-GELU in-kernel.
        ffn = jax.nn.gelu(ffn, approximate=True)
        ffn = jnp.dot(ffn, w2, preferred_element_type=jnp.float32) + b2
        x = _layernorm(x1 + ffn, ln2g, ln2b)

    # ------- span-NER head (nn.Dropout = identity at inference) -------
    # PoolerStartLogits: Linear(H, L); weights zero-padded to PADL output lanes
    # so the store is lane-dense (unmasked vst).
    start_pad = (jnp.dot(x, sw_ref[...], preferred_element_type=jnp.float32)
                 + sb_ref[...])                            # (BS, PADL)
    start_ref[...] = start_pad
    # inference + soft_label=True: label_logit = softmax(start_logit, -1)
    label = _softmax_last(start_pad[:, 0:L])               # (BS, L)
    # PoolerEndLogits: Linear(H+L, H+L) -> tanh -> LayerNorm -> Linear(H+L, L)
    cat = jnp.concatenate([x, label], axis=-1)             # (BS, H+L)
    hl = hl_ref[...]                                       # (3, H+L): d0b, ln_g, ln_b
    h0 = jnp.tanh(jnp.dot(cat, d0w_ref[...], preferred_element_type=jnp.float32)
                  + hl[0:1])
    h0 = _layernorm(h0, hl[1:2], hl[2:3])
    end_ref[...] = (jnp.dot(h0, d1w_ref[...], preferred_element_type=jnp.float32)
                    + d1b_ref[...])                        # lane-dense (BS, PADL)


# ---------------- pallas_call wrapper ----------------
def _full_spec(shape):
    n = len(shape)
    return pl.BlockSpec(tuple(shape), lambda i, n=n: (0,) * n)


def _run_fused_forward(emb, attn_bias, p):
    args = (emb, attn_bias, p['emb_ln'],
            p['qkv_w'], p['qkv_b'], p['ow'], p['w1'], p['b1'], p['w2'], p['hv'],
            p['sw_pad'], p['sb_pad'], p['d0w'], p['hl'], p['d1w_pad'], p['d1b_pad'])
    return pl.pallas_call(
        _fused_forward_kernel,
        out_shape=(jax.ShapeDtypeStruct((BS, PADL), jnp.float32),
                   jax.ShapeDtypeStruct((BS, PADL), jnp.float32)),
        grid=(1,),
        in_specs=[_full_spec(a.shape) for a in args],
        out_specs=(_full_spec((BS, PADL)), _full_spec((BS, PADL))),
        compiler_params=pltpu.CompilerParams(
            dimension_semantics=("arbitrary",)),
    )(*args)


# ---------------- parameters (deterministic synthetic init) ----------------
def init_params(key):
    keys = iter(jax.random.split(key, 64))

    def w(shape):
        return jax.random.normal(next(keys), shape, jnp.float32) * 0.02

    params = {
        'word_emb': w((VOCAB, H)),
        'pos_emb':  w((S, H)),
        'type_emb': w((2, H)),
        'emb_ln':   jnp.stack([jnp.ones((H,), jnp.float32),
                               jnp.zeros((H,), jnp.float32)]),          # (2, H)
    }

    scale = 1.0 / (HD ** 0.5)
    qkv_w, qkv_b, ows, w1s, b1s, w2s, hvs = [], [], [], [], [], [], []
    for _ in range(NUM_LAYERS):
        qw, kw, vw = w((H, H)), w((H, H)), w((H, H))    # [in, out] pre-transposed
        zb = jnp.zeros((1, H), jnp.float32)
        qkv_w.append(jnp.concatenate([qw * scale, kw, vw], axis=1))     # (H, 3H)
        qkv_b.append(jnp.concatenate([zb * scale, zb, zb], axis=1))     # (1, 3H)
        ows.append(w((H, H)))
        w1s.append(w((H, I)))
        b1s.append(jnp.zeros((1, I), jnp.float32))
        w2s.append(w((I, H)))
        ones = jnp.ones((H,), jnp.float32)
        zeros = jnp.zeros((H,), jnp.float32)
        # rows: attn-out bias, ln1 gamma, ln1 beta, ffn-out bias, ln2 gamma, ln2 beta
        hvs.append(jnp.stack([zeros, ones, zeros, zeros, ones, zeros])) # (6, H)
    params['qkv_w'] = jnp.stack(qkv_w)      # (NUM_LAYERS, H, 3H)
    params['qkv_b'] = jnp.stack(qkv_b)      # (NUM_LAYERS, 1, 3H)
    params['ow'] = jnp.stack(ows)           # (NUM_LAYERS, H, H)
    params['w1'] = jnp.stack(w1s)           # (NUM_LAYERS, H, I)
    params['b1'] = jnp.stack(b1s)           # (NUM_LAYERS, 1, I)
    params['w2'] = jnp.stack(w2s)           # (NUM_LAYERS, I, H)
    params['hv'] = jnp.stack(hvs)           # (NUM_LAYERS, 6, H)

    # span head: PoolerStartLogits(H, L), PoolerEndLogits(H+L, L); output
    # columns zero-padded to PADL lanes for lane-dense stores.
    params['sw_pad'] = jnp.pad(w((H, L)), ((0, 0), (0, PADL - L)))      # (H, 128)
    params['sb_pad'] = jnp.zeros((1, PADL), jnp.float32)
    params['d0w'] = w((HL, HL))                                         # (40, 40)
    params['hl'] = jnp.stack([jnp.zeros((HL,), jnp.float32),
                              jnp.ones((HL,), jnp.float32),
                              jnp.zeros((HL,), jnp.float32)])           # (3, 40)
    params['d1w_pad'] = jnp.pad(w((HL, L)), ((0, 0), (0, PADL - L)))    # (40, 128)
    params['d1b_pad'] = jnp.zeros((1, PADL), jnp.float32)
    return params


# ---------------- forward ----------------
@jax.jit
def bert_span_for_ner_forward(params, input_ids, token_type_ids, attention_mask):
    # Embedding gather + sum is glue (plain JAX); everything downstream of the
    # embedding LayerNorm runs inside the single fused Pallas kernel.
    emb = (params['word_emb'][input_ids]
           + params['pos_emb'][None, :, :]
           + params['type_emb'][token_type_ids]).astype(jnp.float32)
    emb = emb.reshape(BS, H)

    # Block-diagonal additive attention bias over the flattened batch: a token
    # may only attend to unmasked tokens of its own batch element.
    mask_flat = attention_mask.reshape(BS).astype(jnp.float32)
    batch_ids = jnp.repeat(jnp.arange(B, dtype=jnp.int32), S)
    allowed = ((batch_ids[:, None] == batch_ids[None, :]).astype(jnp.float32)
               * mask_flat[None, :])
    attn_bias = (1.0 - allowed) * -10000.0                  # (BS, BS)

    start_pad, end_pad = _run_fused_forward(emb, attn_bias, params)
    start_logits = start_pad[:, :L].reshape(B, S, L)
    end_logits = end_pad[:, :L].reshape(B, S, L)
    # TODO(synk): training-time loss branch (CE / focal / label-smoothing over
    # attention-masked positions) is not implemented; this is the inference path.
    return start_logits, end_logits


if __name__ == "__main__":
    key = jax.random.PRNGKey(0)
    pkey, ikey = jax.random.split(key)
    params = init_params(pkey)

    input_ids = jax.random.randint(ikey, (B, S), 0, VOCAB, dtype=jnp.int32)
    token_type_ids = jnp.zeros((B, S), jnp.int32)
    attention_mask = jnp.ones((B, S), jnp.int32)

    start_logits, end_logits = bert_span_for_ner_forward(
        params, input_ids, token_type_ids, attention_mask)
    jax.block_until_ready((start_logits, end_logits))

    assert start_logits.shape == (B, S, L)
    assert end_logits.shape == (B, S, L)
    print("KERNEL_OK")
</pallas_src>

<mosaic_0001>
module attributes {stable_mosaic.version = 11 : i64} {
  func.func @_fused_forward_kernel(%arg0: i32, %arg1: memref<16x32xf32, #tpu.memory_space<vmem>>, %arg2: memref<16x16xf32, #tpu.memory_space<vmem>>, %arg3: memref<2x32xf32, #tpu.memory_space<vmem>>, %arg4: memref<2x32x96xf32, #tpu.memory_space<vmem>>, %arg5: memref<2x1x96xf32, #tpu.memory_space<vmem>>, %arg6: memref<2x32x32xf32, #tpu.memory_space<vmem>>, %arg7: memref<2x32x64xf32, #tpu.memory_space<vmem>>, %arg8: memref<2x1x64xf32, #tpu.memory_space<vmem>>, %arg9: memref<2x64x32xf32, #tpu.memory_space<vmem>>, %arg10: memref<2x6x32xf32, #tpu.memory_space<vmem>>, %arg11: memref<32x128xf32, #tpu.memory_space<vmem>>, %arg12: memref<1x128xf32, #tpu.memory_space<vmem>>, %arg13: memref<40x40xf32, #tpu.memory_space<vmem>>, %arg14: memref<3x40xf32, #tpu.memory_space<vmem>>, %arg15: memref<40x128xf32, #tpu.memory_space<vmem>>, %arg16: memref<1x128xf32, #tpu.memory_space<vmem>>, %arg17: memref<16x128xf32, #tpu.memory_space<vmem>>, %arg18: memref<16x128xf32, #tpu.memory_space<vmem>>) attributes {dimension_semantics = [#tpu.dimension_semantics<arbitrary>], iteration_bounds = array<i64: 1>, scalar_prefetch = 0 : i64, scratch_operands = 0 : i64, tpu.core_type = #tpu.core_type<tc>, window_params = [{pipeline_mode = #tpu.pipeline_mode<synchronous>, transform_indices = @transform_0, window_bounds = array<i64: 16, 32>}, {pipeline_mode = #tpu.pipeline_mode<synchronous>, transform_indices = @transform_1, window_bounds = array<i64: 16, 16>}, {pipeline_mode = #tpu.pipeline_mode<synchronous>, transform_indices = @transform_2, window_bounds = array<i64: 2, 32>}, {pipeline_mode = #tpu.pipeline_mode<synchronous>, transform_indices = @transform_3, window_bounds = array<i64: 2, 32, 96>}, {pipeline_mode = #tpu.pipeline_mode<synchronous>, transform_indices = @transform_4, window_bounds = array<i64: 2, 1, 96>}, {pipeline_mode = #tpu.pipeline_mode<synchronous>, transform_indices = @transform_5, window_bounds = array<i64: 2, 32, 32>}, {pipeline_mode = #tpu.pipeline_mode<synchronous>, transform_indices = @transform_6, window_bounds = array<i64: 2, 32, 64>}, {pipeline_mode = #tpu.pipeline_mode<synchronous>, transform_indices = @transform_7, window_bounds = array<i64: 2, 1, 64>}, {pipeline_mode = #tpu.pipeline_mode<synchronous>, transform_indices = @transform_8, window_bounds = array<i64: 2, 64, 32>}, {pipeline_mode = #tpu.pipeline_mode<synchronous>, transform_indices = @transform_9, window_bounds = array<i64: 2, 6, 32>}, {pipeline_mode = #tpu.pipeline_mode<synchronous>, transform_indices = @transform_10, window_bounds = array<i64: 32, 128>}, {pipeline_mode = #tpu.pipeline_mode<synchronous>, transform_indices = @transform_11, window_bounds = array<i64: 1, 128>}, {pipeline_mode = #tpu.pipeline_mode<synchronous>, transform_indices = @transform_12, window_bounds = array<i64: 40, 40>}, {pipeline_mode = #tpu.pipeline_mode<synchronous>, transform_indices = @transform_13, window_bounds = array<i64: 3, 40>}, {pipeline_mode = #tpu.pipeline_mode<synchronous>, transform_indices = @transform_14, window_bounds = array<i64: 40, 128>}, {pipeline_mode = #tpu.pipeline_mode<synchronous>, transform_indices = @transform_15, window_bounds = array<i64: 1, 128>}, {pipeline_mode = #tpu.pipeline_mode<synchronous>, transform_indices = @transform_16, window_bounds = array<i64: 16, 128>}, {pipeline_mode = #tpu.pipeline_mode<synchronous>, transform_indices = @transform_17, window_bounds = array<i64: 16, 128>}]} {
    %c0 = arith.constant 0 : index
    %c0_0 = arith.constant 0 : index
    %0 = vector.load %arg1[%c0, %c0_0] : memref<16x32xf32, #tpu.memory_space<vmem>>, vector<16x32xf32>
    %c0_1 = arith.constant 0 : index
    %c0_2 = arith.constant 0 : index
    %1 = vector.load %arg2[%c0_1, %c0_2] : memref<16x16xf32, #tpu.memory_space<vmem>>, vector<16x16xf32>
    %c0_3 = arith.constant 0 : index
    %c0_4 = arith.constant 0 : index
    %2 = vector.load %arg3[%c0_3, %c0_4] : memref<2x32xf32, #tpu.memory_space<vmem>>, vector<2x32xf32>
    %3 = vector.extract_strided_slice %2 {offsets = [0, 0], sizes = [1, 32], strides = [1, 1]} : vector<2x32xf32> to vector<1x32xf32>
    %4 = vector.extract_strided_slice %2 {offsets = [1, 0], sizes = [1, 32], strides = [1, 1]} : vector<2x32xf32> to vector<1x32xf32>
    %cst = arith.constant dense<0.000000e+00> : vector<16xf32>
    %5 = vector.multi_reduction <add>, %0, %cst [1] : vector<16x32xf32> to vector<16xf32>
    %6 = vector.shape_cast %5 : vector<16xf32> to vector<16x1xf32>
    %cst_5 = arith.constant 3.200000e+01 : f32
    %7 = vector.broadcast %cst_5 : f32 to vector<16x1xf32>
    %8 = arith.divf %6, %7 : vector<16x1xf32>
    %9 = vector.broadcast %8 : vector<16x1xf32> to vector<16x32xf32>
    %10 = arith.subf %0, %9 : vector<16x32xf32>
    %11 = arith.mulf %10, %10 : vector<16x32xf32>
    %cst_6 = arith.constant dense<0.000000e+00> : vector<16xf32>
    %12 = vector.multi_reduction <add>, %11, %cst_6 [1] : vector<16x32xf32> to vector<16xf32>
    %13 = vector.shape_cast %12 : vector<16xf32> to vector<16x1xf32>
    %cst_7 = arith.constant 3.200000e+01 : f32
    %14 = vector.broadcast %cst_7 : f32 to vector<16x1xf32>
    %15 = arith.divf %13, %14 : vector<16x1xf32>
    %16 = vector.broadcast %8 : vector<16x1xf32> to vector<16x32xf32>
    %17 = arith.subf %0, %16 : vector<16x32xf32>
    %cst_8 = arith.constant 9.99999996E-13 : f32
    %18 = vector.broadcast %cst_8 : f32 to vector<16x1xf32>
    %19 = arith.addf %15, %18 : vector<16x1xf32>
    %20 = math.rsqrt %19 : vector<16x1xf32>
    %21 = vector.broadcast %20 : vector<16x1xf32> to vector<16x32xf32>
    %22 = arith.mulf %17, %21 : vector<16x32xf32>
    %23 = vector.broadcast %3 : vector<1x32xf32> to vector<16x32xf32>
    %24 = arith.mulf %22, %23 : vector<16x32xf32>
    %25 = vector.broadcast %4 : vector<1x32xf32> to vector<16x32xf32>
    %26 = arith.addf %24, %25 : vector<16x32xf32>
    %c0_9 = arith.constant 0 : index
    %c0_10 = arith.constant 0 : index
    %c0_11 = arith.constant 0 : index
    %27 = vector.load %arg4[%c0_9, %c0_10, %c0_11] : memref<2x32x96xf32, #tpu.memory_space<vmem>>, vector<1x32x96xf32>
    %28 = vector.shape_cast %27 : vector<1x32x96xf32> to vector<32x96xf32>
    %c0_12 = arith.constant 0 : index
    %c0_13 = arith.constant 0 : index
    %c0_14 = arith.constant 0 : index
    %29 = vector.load %arg5[%c0_12, %c0_13, %c0_14] : memref<2x1x96xf32, #tpu.memory_space<vmem>>, vector<1x1x96xf32>
    %30 = vector.shape_cast %29 : vector<1x1x96xf32> to vector<1x96xf32>
    %c0_15 = arith.constant 0 : index
    %c0_16 = arith.constant 0 : index
    %c0_17 = arith.constant 0 : index
    %31 = vector.load %arg6[%c0_15, %c0_16, %c0_17] : memref<2x32x32xf32, #tpu.memory_space<vmem>>, vector<1x32x32xf32>
    %32 = vector.shape_cast %31 : vector<1x32x32xf32> to vector<32x32xf32>
    %c0_18 = arith.constant 0 : index
    %c0_19 = arith.constant 0 : index
    %c0_20 = arith.constant 0 : index
    %33 = vector.load %arg7[%c0_18, %c0_19, %c0_20] : memref<2x32x64xf32, #tpu.memory_space<vmem>>, vector<1x32x64xf32>
    %34 = vector.shape_cast %33 : vector<1x32x64xf32> to vector<32x64xf32>
    %c0_21 = arith.constant 0 : index
    %c0_22 = arith.constant 0 : index
    %c0_23 = arith.constant 0 : index
    %35 = vector.load %arg8[%c0_21, %c0_22, %c0_23] : memref<2x1x64xf32, #tpu.memory_space<vmem>>, vector<1x1x64xf32>
    %36 = vector.shape_cast %35 : vector<1x1x64xf32> to vector<1x64xf32>
    %c0_24 = arith.constant 0 : index
    %c0_25 = arith.constant 0 : index
    %c0_26 = arith.constant 0 : index
    %37 = vector.load %arg9[%c0_24, %c0_25, %c0_26] : memref<2x64x32xf32, #tpu.memory_space<vmem>>, vector<1x64x32xf32>
    %38 = vector.shape_cast %37 : vector<1x64x32xf32> to vector<64x32xf32>
    %c0_27 = arith.constant 0 : index
    %c0_28 = arith.constant 0 : index
    %c0_29 = arith.constant 0 : index
    %39 = vector.load %arg10[%c0_27, %c0_28, %c0_29] : memref<2x6x32xf32, #tpu.memory_space<vmem>>, vector<1x6x32xf32>
    %40 = vector.shape_cast %39 : vector<1x6x32xf32> to vector<6x32xf32>
    %41 = vector.extract_strided_slice %40 {offsets = [0, 0], sizes = [1, 32], strides = [1, 1]} : vector<6x32xf32> to vector<1x32xf32>
    %42 = vector.extract_strided_slice %40 {offsets = [1, 0], sizes = [1, 32], strides = [1, 1]} : vector<6x32xf32> to vector<1x32xf32>
    %43 = vector.extract_strided_slice %40 {offsets = [2, 0], sizes = [1, 32], strides = [1, 1]} : vector<6x32xf32> to vector<1x32xf32>
    %44 = vector.extract_strided_slice %40 {offsets = [3, 0], sizes = [1, 32], strides = [1, 1]} : vector<6x32xf32> to vector<1x32xf32>
    %45 = vector.extract_strided_slice %40 {offsets = [4, 0], sizes = [1, 32], strides = [1, 1]} : vector<6x32xf32> to vector<1x32xf32>
    %46 = vector.extract_strided_slice %40 {offsets = [5, 0], sizes = [1, 32], strides = [1, 1]} : vector<6x32xf32> to vector<1x32xf32>
    %cst_30 = arith.constant dense<0.000000e+00> : vector<16x96xf32>
    %47 = tpu.matmul %26, %28, %cst_30 {dimension_numbers = #tpu.dot_dimension_numbers<[1], [0], [0], [1], [0, 0, 1, 1], [], []>} : vector<16x32xf32>, vector<32x96xf32>, vector<16x96xf32> -> vector<16x96xf32>
    %48 = vector.broadcast %30 : vector<1x96xf32> to vector<16x96xf32>
    %49 = arith.addf %47, %48 : vector<16x96xf32>
    %50 = vector.extract_strided_slice %49 {offsets = [0, 0], sizes = [16, 32], strides = [1, 1]} : vector<16x96xf32> to vector<16x32xf32>
    %51 = vector.extract_strided_slice %49 {offsets = [0, 32], sizes = [16, 32], strides = [1, 1]} : vector<16x96xf32> to vector<16x32xf32>
    %52 = vector.extract_strided_slice %49 {offsets = [0, 64], sizes = [16, 32], strides = [1, 1]} : vector<16x96xf32> to vector<16x32xf32>
    %53 = vector.extract_strided_slice %50 {offsets = [0, 0], sizes = [16, 16], strides = [1, 1]} : vector<16x32xf32> to vector<16x16xf32>
    %54 = vector.extract_strided_slice %51 {offsets = [0, 0], sizes = [16, 16], strides = [1, 1]} : vector<16x32xf32> to vector<16x16xf32>
    %55 = vector.extract_strided_slice %52 {offsets = [0, 0], sizes = [16, 16], strides = [1, 1]} : vector<16x32xf32> to vector<16x16xf32>
    %cst_31 = arith.constant dense<0.000000e+00> : vector<16x16xf32>
    %56 = tpu.matmul %53, %54, %cst_31 {dimension_numbers = #tpu.dot_dimension_numbers<[1], [1], [0], [0], [0, 0, 1, 0], [], []>} : vector<16x16xf32>, vector<16x16xf32>, vector<16x16xf32> -> vector<16x16xf32>
    %57 = arith.addf %56, %1 : vector<16x16xf32>
    %cst_32 = arith.constant dense<0xFF800000> : vector<16xf32>
    %58 = vector.multi_reduction <maximumf>, %57, %cst_32 [1] : vector<16x16xf32> to vector<16xf32>
    %59 = vector.shape_cast %58 : vector<16xf32> to vector<16x1xf32>
    %60 = vector.broadcast %59 : vector<16x1xf32> to vector<16x16xf32>
    %61 = arith.subf %57, %60 : vector<16x16xf32>
    %62 = math.exp %61 : vector<16x16xf32>
    %cst_33 = arith.constant dense<0.000000e+00> : vector<16xf32>
    %63 = vector.multi_reduction <add>, %62, %cst_33 [1] : vector<16x16xf32> to vector<16xf32>
    %64 = vector.shape_cast %63 : vector<16xf32> to vector<16x1xf32>
    %65 = tpu.reciprocal %64 {approx = true} : vector<16x1xf32> -> vector<16x1xf32>
    %66 = vector.broadcast %65 : vector<16x1xf32> to vector<16x16xf32>
    %67 = arith.mulf %62, %66 : vector<16x16xf32>
    %cst_34 = arith.constant dense<0.000000e+00> : vector<16x16xf32>
    %68 = tpu.matmul %67, %55, %cst_34 {dimension_numbers = #tpu.dot_dimension_numbers<[1], [0], [0], [1], [0, 0, 1, 1], [], []>} : vector<16x16xf32>, vector<16x16xf32>, vector<16x16xf32> -> vector<16x16xf32>
    %69 = vector.extract_strided_slice %50 {offsets = [0, 16], sizes = [16, 16], strides = [1, 1]} : vector<16x32xf32> to vector<16x16xf32>
    %70 = vector.extract_strided_slice %51 {offsets = [0, 16], sizes = [16, 16], strides = [1, 1]} : vector<16x32xf32> to vector<16x16xf32>
    %71 = vector.extract_strided_slice %52 {offsets = [0, 16], sizes = [16, 16], strides = [1, 1]} : vector<16x32xf32> to vector<16x16xf32>
    %cst_35 = arith.constant dense<0.000000e+00> : vector<16x16xf32>
    %72 = tpu.matmul %69, %70, %cst_35 {dimension_numbers = #tpu.dot_dimension_numbers<[1], [1], [0], [0], [0, 0, 1, 0], [], []>} : vector<16x16xf32>, vector<16x16xf32>, vector<16x16xf32> -> vector<16x16xf32>
    %73 = arith.addf %72, %1 : vector<16x16xf32>
    %cst_36 = arith.constant dense<0xFF800000> : vector<16xf32>
    %74 = vector.multi_reduction <maximumf>, %73, %cst_36 [1] : vector<16x16xf32> to vector<16xf32>
    %75 = vector.shape_cast %74 : vector<16xf32> to vector<16x1xf32>
    %76 = vector.broadcast %75 : vector<16x1xf32> to vector<16x16xf32>
    %77 = arith.subf %73, %76 : vector<16x16xf32>
    %78 = math.exp %77 : vector<16x16xf32>
    %cst_37 = arith.constant dense<0.000000e+00> : vector<16xf32>
    %79 = vector.multi_reduction <add>, %78, %cst_37 [1] : vector<16x16xf32> to vector<16xf32>
    %80 = vector.shape_cast %79 : vector<16xf32> to vector<16x1xf32>
    %81 = tpu.reciprocal %80 {approx = true} : vector<16x1xf32> -> vector<16x1xf32>
    %82 = vector.broadcast %81 : vector<16x1xf32> to vector<16x16xf32>
    %83 = arith.mulf %78, %82 : vector<16x16xf32>
    %cst_38 = arith.constant dense<0.000000e+00> : vector<16x16xf32>
    %84 = tpu.matmul %83, %71, %cst_38 {dimension_numbers = #tpu.dot_dimension_numbers<[1], [0], [0], [1], [0, 0, 1, 1], [], []>} : vector<16x16xf32>, vector<16x16xf32>, vector<16x16xf32> -> vector<16x16xf32>
    %85 = tpu.concatenate %68, %84 in 1 : vector<16x16xf32>, vector<16x16xf32> -> vector<16x32xf32>
    %cst_39 = arith.constant dense<0.000000e+00> : vector<16x32xf32>
    %86 = tpu.matmul %85, %32, %cst_39 {dimension_numbers = #tpu.dot_dimension_numbers<[1], [0], [0], [1], [0, 0, 1, 1], [], []>} : vector<16x32xf32>, vector<32x32xf32>, vector<16x32xf32> -> vector<16x32xf32>
    %87 = vector.broadcast %41 : vector<1x32xf32> to vector<16x32xf32>
    %88 = arith.addf %86, %87 : vector<16x32xf32>
    %89 = arith.addf %26, %88 : vector<16x32xf32>
    %cst_40 = arith.constant dense<0.000000e+00> : vector<16xf32>
    %90 = vector.multi_reduction <add>, %89, %cst_40 [1] : vector<16x32xf32> to vector<16xf32>
    %91 = vector.shape_cast %90 : vector<16xf32> to vector<16x1xf32>
    %cst_41 = arith.constant 3.200000e+01 : f32
    %92 = vector.broadcast %cst_41 : f32 to vector<16x1xf32>
    %93 = arith.divf %91, %92 : vector<16x1xf32>
    %94 = vector.broadcast %93 : vector<16x1xf32> to vector<16x32xf32>
    %95 = arith.subf %89, %94 : vector<16x32xf32>
    %96 = arith.mulf %95, %95 : vector<16x32xf32>
    %cst_42 = arith.constant dense<0.000000e+00> : vector<16xf32>
    %97 = vector.multi_reduction <add>, %96, %cst_42 [1] : vector<16x32xf32> to vector<16xf32>
    %98 = vector.shape_cast %97 : vector<16xf32> to vector<16x1xf32>
    %cst_43 = arith.constant 3.200000e+01 : f32
    %99 = vector.broadcast %cst_43 : f32 to vector<16x1xf32>
    %100 = arith.divf %98, %99 : vector<16x1xf32>
    %101 = vector.broadcast %93 : vector<16x1xf32> to vector<16x32xf32>
    %102 = arith.subf %89, %101 : vector<16x32xf32>
    %cst_44 = arith.constant 9.99999996E-13 : f32
    %103 = vector.broadcast %cst_44 : f32 to vector<16x1xf32>
    %104 = arith.addf %100, %103 : vector<16x1xf32>
    %105 = math.rsqrt %104 : vector<16x1xf32>
    %106 = vector.broadcast %105 : vector<16x1xf32> to vector<16x32xf32>
    %107 = arith.mulf %102, %106 : vector<16x32xf32>
    %108 = vector.broadcast %42 : vector<1x32xf32> to vector<16x32xf32>
    %109 = arith.mulf %107, %108 : vector<16x32xf32>
    %110 = vector.broadcast %43 : vector<1x32xf32> to vector<16x32xf32>
    %111 = arith.addf %109, %110 : vector<16x32xf32>
    %cst_45 = arith.constant dense<0.000000e+00> : vector<16x64xf32>
    %112 = tpu.matmul %111, %34, %cst_45 {dimension_numbers = #tpu.dot_dimension_numbers<[1], [0], [0], [1], [0, 0, 1, 1], [], []>} : vector<16x32xf32>, vector<32x64xf32>, vector<16x64xf32> -> vector<16x64xf32>
    %113 = vector.broadcast %36 : vector<1x64xf32> to vector<16x64xf32>
    %114 = arith.addf %112, %113 : vector<16x64xf32>
    %115 = arith.mulf %114, %114 : vector<16x64xf32>
    %116 = arith.mulf %114, %115 : vector<16x64xf32>
    %cst_46 = arith.constant 4.471500e-02 : f32
    %117 = vector.broadcast %cst_46 : f32 to vector<16x64xf32>
    %118 = arith.mulf %117, %116 : vector<16x64xf32>
    %119 = arith.addf %114, %118 : vector<16x64xf32>
    %cst_47 = arith.constant 0.797884583 : f32
    %120 = vector.broadcast %cst_47 : f32 to vector<16x64xf32>
    %121 = arith.mulf %120, %119 : vector<16x64xf32>
    %122 = math.tanh %121 : vector<16x64xf32>
    %cst_48 = arith.constant 1.000000e+00 : f32
    %123 = vector.broadcast %cst_48 : f32 to vector<16x64xf32>
    %124 = arith.addf %123, %122 : vector<16x64xf32>
    %cst_49 = arith.constant 5.000000e-01 : f32
    %125 = vector.broadcast %cst_49 : f32 to vector<16x64xf32>
    %126 = arith.mulf %125, %124 : vector<16x64xf32>
    %127 = arith.mulf %114, %126 : vector<16x64xf32>
    %cst_50 = arith.constant dense<0.000000e+00> : vector<16x32xf32>
    %128 = tpu.matmul %127, %38, %cst_50 {dimension_numbers = #tpu.dot_dimension_numbers<[1], [0], [0], [1], [0, 0, 1, 1], [], []>} : vector<16x64xf32>, vector<64x32xf32>, vector<16x32xf32> -> vector<16x32xf32>
    %129 = vector.broadcast %44 : vector<1x32xf32> to vector<16x32xf32>
    %130 = arith.addf %128, %129 : vector<16x32xf32>
    %131 = arith.addf %111, %130 : vector<16x32xf32>
    %cst_51 = arith.constant dense<0.000000e+00> : vector<16xf32>
    %132 = vector.multi_reduction <add>, %131, %cst_51 [1] : vector<16x32xf32> to vector<16xf32>
    %133 = vector.shape_cast %132 : vector<16xf32> to vector<16x1xf32>
    %cst_52 = arith.constant 3.200000e+01 : f32
    %134 = vector.broadcast %cst_52 : f32 to vector<16x1xf32>
    %135 = arith.divf %133, %134 : vector<16x1xf32>
    %136 = vector.broadcast %135 : vector<16x1xf32> to vector<16x32xf32>
    %137 = arith.subf %131, %136 : vector<16x32xf32>
    %138 = arith.mulf %137, %137 : vector<16x32xf32>
    %cst_53 = arith.constant dense<0.000000e+00> : vector<16xf32>
    %139 = vector.multi_reduction <add>, %138, %cst_53 [1] : vector<16x32xf32> to vector<16xf32>
    %140 = vector.shape_cast %139 : vector<16xf32> to vector<16x1xf32>
    %cst_54 = arith.constant 3.200000e+01 : f32
    %141 = vector.broadcast %cst_54 : f32 to vector<16x1xf32>
    %142 = arith.divf %140, %141 : vector<16x1xf32>
    %143 = vector.broadcast %135 : vector<16x1xf32> to vector<16x32xf32>
    %144 = arith.subf %131, %143 : vector<16x32xf32>
    %cst_55 = arith.constant 9.99999996E-13 : f32
    %145 = vector.broadcast %cst_55 : f32 to vector<16x1xf32>
    %146 = arith.addf %142, %145 : vector<16x1xf32>
    %147 = math.rsqrt %146 : vector<16x1xf32>
    %148 = vector.broadcast %147 : vector<16x1xf32> to vector<16x32xf32>
    %149 = arith.mulf %144, %148 : vector<16x32xf32>
    %150 = vector.broadcast %45 : vector<1x32xf32> to vector<16x32xf32>
    %151 = arith.mulf %149, %150 : vector<16x32xf32>
    %152 = vector.broadcast %46 : vector<1x32xf32> to vector<16x32xf32>
    %153 = arith.addf %151, %152 : vector<16x32xf32>
    %c1 = arith.constant 1 : index
    %c0_56 = arith.constant 0 : index
    %c0_57 = arith.constant 0 : index
    %154 = vector.load %arg4[%c1, %c0_56, %c0_57] : memref<2x32x96xf32, #tpu.memory_space<vmem>>, vector<1x32x96xf32>
    %155 = vector.shape_cast %154 : vector<1x32x96xf32> to vector<32x96xf32>
    %c1_58 = arith.constant 1 : index
    %c0_59 = arith.constant 0 : index
    %c0_60 = arith.constant 0 : index
    %156 = vector.load %arg5[%c1_58, %c0_59, %c0_60] : memref<2x1x96xf32, #tpu.memory_space<vmem>>, vector<1x1x96xf32>
    %157 = vector.shape_cast %156 : vector<1x1x96xf32> to vector<1x96xf32>
    %c1_61 = arith.constant 1 : index
    %c0_62 = arith.constant 0 : index
    %c0_63 = arith.constant 0 : index
    %158 = vector.load %arg6[%c1_61, %c0_62, %c0_63] : memref<2x32x32xf32, #tpu.memory_space<vmem>>, vector<1x32x32xf32>
    %159 = vector.shape_cast %158 : vector<1x32x32xf32> to vector<32x32xf32>
    %c1_64 = arith.constant 1 : index
    %c0_65 = arith.constant 0 : index
    %c0_66 = arith.constant 0 : index
    %160 = vector.load %arg7[%c1_64, %c0_65, %c0_66] : memref<2x32x64xf32, #tpu.memory_space<vmem>>, vector<1x32x64xf32>
    %161 = vector.shape_cast %160 : vector<1x32x64xf32> to vector<32x64xf32>
    %c1_67 = arith.constant 1 : index
    %c0_68 = arith.constant 0 : index
    %c0_69 = arith.constant 0 : index
    %162 = vector.load %arg8[%c1_67, %c0_68, %c0_69] : memref<2x1x64xf32, #tpu.memory_space<vmem>>, vector<1x1x64xf32>
    %163 = vector.shape_cast %162 : vector<1x1x64xf32> to vector<1x64xf32>
    %c1_70 = arith.constant 1 : index
    %c0_71 = arith.constant 0 : index
    %c0_72 = arith.constant 0 : index
    %164 = vector.load %arg9[%c1_70, %c0_71, %c0_72] : memref<2x64x32xf32, #tpu.memory_space<vmem>>, vector<1x64x32xf32>
    %165 = vector.shape_cast %164 : vector<1x64x32xf32> to vector<64x32xf32>
    %c1_73 = arith.constant 1 : index
    %c0_74 = arith.constant 0 : index
    %c0_75 = arith.constant 0 : index
    %166 = vector.load %arg10[%c1_73, %c0_74, %c0_75] : memref<2x6x32xf32, #tpu.memory_space<vmem>>, vector<1x6x32xf32>
    %167 = vector.shape_cast %166 : vector<1x6x32xf32> to vector<6x32xf32>
    %168 = vector.extract_strided_slice %167 {offsets = [0, 0], sizes = [1, 32], strides = [1, 1]} : vector<6x32xf32> to vector<1x32xf32>
    %169 = vector.extract_strided_slice %167 {offsets = [1, 0], sizes = [1, 32], strides = [1, 1]} : vector<6x32xf32> to vector<1x32xf32>
    %170 = vector.extract_strided_slice %167 {offsets = [2, 0], sizes = [1, 32], strides = [1, 1]} : vector<6x32xf32> to vector<1x32xf32>
    %171 = vector.extract_strided_slice %167 {offsets = [3, 0], sizes = [1, 32], strides = [1, 1]} : vector<6x32xf32> to vector<1x32xf32>
    %172 = vector.extract_strided_slice %167 {offsets = [4, 0], sizes = [1, 32], strides = [1, 1]} : vector<6x32xf32> to vector<1x32xf32>
    %173 = vector.extract_strided_slice %167 {offsets = [5, 0], sizes = [1, 32], strides = [1, 1]} : vector<6x32xf32> to vector<1x32xf32>
    %cst_76 = arith.constant dense<0.000000e+00> : vector<16x96xf32>
    %174 = tpu.matmul %153, %155, %cst_76 {dimension_numbers = #tpu.dot_dimension_numbers<[1], [0], [0], [1], [0, 0, 1, 1], [], []>} : vector<16x32xf32>, vector<32x96xf32>, vector<16x96xf32> -> vector<16x96xf32>
    %175 = vector.broadcast %157 : vector<1x96xf32> to vector<16x96xf32>
    %176 = arith.addf %174, %175 : vector<16x96xf32>
    %177 = vector.extract_strided_slice %176 {offsets = [0, 0], sizes = [16, 32], strides = [1, 1]} : vector<16x96xf32> to vector<16x32xf32>
    %178 = vector.extract_strided_slice %176 {offsets = [0, 32], sizes = [16, 32], strides = [1, 1]} : vector<16x96xf32> to vector<16x32xf32>
    %179 = vector.extract_strided_slice %176 {offsets = [0, 64], sizes = [16, 32], strides = [1, 1]} : vector<16x96xf32> to vector<16x32xf32>
    %180 = vector.extract_strided_slice %177 {offsets = [0, 0], sizes = [16, 16], strides = [1, 1]} : vector<16x32xf32> to vector<16x16xf32>
    %181 = vector.extract_strided_slice %178 {offsets = [0, 0], sizes = [16, 16], strides = [1, 1]} : vector<16x32xf32> to vector<16x16xf32>
    %182 = vector.extract_strided_slice %179 {offsets = [0, 0], sizes = [16, 16], strides = [1, 1]} : vector<16x32xf32> to vector<16x16xf32>
    %cst_77 = arith.constant dense<0.000000e+00> : vector<16x16xf32>
    %183 = tpu.matmul %180, %181, %cst_77 {dimension_numbers = #tpu.dot_dimension_numbers<[1], [1], [0], [0], [0, 0, 1, 0], [], []>} : vector<16x16xf32>, vector<16x16xf32>, vector<16x16xf32> -> vector<16x16xf32>
    %184 = arith.addf %183, %1 : vector<16x16xf32>
    %cst_78 = arith.constant dense<0xFF800000> : vector<16xf32>
    %185 = vector.multi_reduction <maximumf>, %184, %cst_78 [1] : vector<16x16xf32> to vector<16xf32>
    %186 = vector.shape_cast %185 : vector<16xf32> to vector<16x1xf32>
    %187 = vector.broadcast %186 : vector<16x1xf32> to vector<16x16xf32>
    %188 = arith.subf %184, %187 : vector<16x16xf32>
    %189 = math.exp %188 : vector<16x16xf32>
    %cst_79 = arith.constant dense<0.000000e+00> : vector<16xf32>
    %190 = vector.multi_reduction <add>, %189, %cst_79 [1] : vector<16x16xf32> to vector<16xf32>
    %191 = vector.shape_cast %190 : vector<16xf32> to vector<16x1xf32>
    %192 = tpu.reciprocal %191 {approx = true} : vector<16x1xf32> -> vector<16x1xf32>
    %193 = vector.broadcast %192 : vector<16x1xf32> to vector<16x16xf32>
    %194 = arith.mulf %189, %193 : vector<16x16xf32>
    %cst_80 = arith.constant dense<0.000000e+00> : vector<16x16xf32>
    %195 = tpu.matmul %194, %182, %cst_80 {dimension_numbers = #tpu.dot_dimension_numbers<[1], [0], [0], [1], [0, 0, 1, 1], [], []>} : vector<16x16xf32>, vector<16x16xf32>, vector<16x16xf32> -> vector<16x16xf32>
    %196 = vector.extract_strided_slice %177 {offsets = [0, 16], sizes = [16, 16], strides = [1, 1]} : vector<16x32xf32> to vector<16x16xf32>
    %197 = vector.extract_strided_slice %178 {offsets = [0, 16], sizes = [16, 16], strides = [1, 1]} : vector<16x32xf32> to vector<16x16xf32>
    %198 = vector.extract_strided_slice %179 {offsets = [0, 16], sizes = [16, 16], strides = [1, 1]} : vector<16x32xf32> to vector<16x16xf32>
    %cst_81 = arith.constant dense<0.000000e+00> : vector<16x16xf32>
    %199 = tpu.matmul %196, %197, %cst_81 {dimension_numbers = #tpu.dot_dimension_numbers<[1], [1], [0], [0], [0, 0, 1, 0], [], []>} : vector<16x16xf32>, vector<16x16xf32>, vector<16x16xf32> -> vector<16x16xf32>
    %200 = arith.addf %199, %1 : vector<16x16xf32>
    %cst_82 = arith.constant dense<0xFF800000> : vector<16xf32>
    %201 = vector.multi_reduction <maximumf>, %200, %cst_82 [1] : vector<16x16xf32> to vector<16xf32>
    %202 = vector.shape_cast %201 : vector<16xf32> to vector<16x1xf32>
    %203 = vector.broadcast %202 : vector<16x1xf32> to vector<16x16xf32>
    %204 = arith.subf %200, %203 : vector<16x16xf32>
    %205 = math.exp %204 : vector<16x16xf32>
    %cst_83 = arith.constant dense<0.000000e+00> : vector<16xf32>
    %206 = vector.multi_reduction <add>, %205, %cst_83 [1] : vector<16x16xf32> to vector<16xf32>
    %207 = vector.shape_cast %206 : vector<16xf32> to vector<16x1xf32>
    %208 = tpu.reciprocal %207 {approx = true} : vector<16x1xf32> -> vector<16x1xf32>
    %209 = vector.broadcast %208 : vector<16x1xf32> to vector<16x16xf32>
    %210 = arith.mulf %205, %209 : vector<16x16xf32>
    %cst_84 = arith.constant dense<0.000000e+00> : vector<16x16xf32>
    %211 = tpu.matmul %210, %198, %cst_84 {dimension_numbers = #tpu.dot_dimension_numbers<[1], [0], [0], [1], [0, 0, 1, 1], [], []>} : vector<16x16xf32>, vector<16x16xf32>, vector<16x16xf32> -> vector<16x16xf32>
    %212 = tpu.concatenate %195, %211 in 1 : vector<16x16xf32>, vector<16x16xf32> -> vector<16x32xf32>
    %cst_85 = arith.constant dense<0.000000e+00> : vector<16x32xf32>
    %213 = tpu.matmul %212, %159, %cst_85 {dimension_numbers = #tpu.dot_dimension_numbers<[1], [0], [0], [1], [0, 0, 1, 1], [], []>} : vector<16x32xf32>, vector<32x32xf32>, vector<16x32xf32> -> vector<16x32xf32>
    %214 = vector.broadcast %168 : vector<1x32xf32> to vector<16x32xf32>
    %215 = arith.addf %213, %214 : vector<16x32xf32>
    %216 = arith.addf %153, %215 : vector<16x32xf32>
    %cst_86 = arith.constant dense<0.000000e+00> : vector<16xf32>
    %217 = vector.multi_reduction <add>, %216, %cst_86 [1] : vector<16x32xf32> to vector<16xf32>
    %218 = vector.shape_cast %217 : vector<16xf32> to vector<16x1xf32>
    %cst_87 = arith.constant 3.200000e+01 : f32
    %219 = vector.broadcast %cst_87 : f32 to vector<16x1xf32>
    %220 = arith.divf %218, %219 : vector<16x1xf32>
    %221 = vector.broadcast %220 : vector<16x1xf32> to vector<16x32xf32>
    %222 = arith.subf %216, %221 : vector<16x32xf32>
    %223 = arith.mulf %222, %222 : vector<16x32xf32>
    %cst_88 = arith.constant dense<0.000000e+00> : vector<16xf32>
    %224 = vector.multi_reduction <add>, %223, %cst_88 [1] : vector<16x32xf32> to vector<16xf32>
    %225 = vector.shape_cast %224 : vector<16xf32> to vector<16x1xf32>
    %cst_89 = arith.constant 3.200000e+01 : f32
    %226 = vector.broadcast %cst_89 : f32 to vector<16x1xf32>
    %227 = arith.divf %225, %226 : vector<16x1xf32>
    %228 = vector.broadcast %220 : vector<16x1xf32> to vector<16x32xf32>
    %229 = arith.subf %216, %228 : vector<16x32xf32>
    %cst_90 = arith.constant 9.99999996E-13 : f32
    %230 = vector.broadcast %cst_90 : f32 to vector<16x1xf32>
    %231 = arith.addf %227, %230 : vector<16x1xf32>
    %232 = math.rsqrt %231 : vector<16x1xf32>
    %233 = vector.broadcast %232 : vector<16x1xf32> to vector<16x32xf32>
    %234 = arith.mulf %229, %233 : vector<16x32xf32>
    %235 = vector.broadcast %169 : vector<1x32xf32> to vector<16x32xf32>
    %236 = arith.mulf %234, %235 : vector<16x32xf32>
    %237 = vector.broadcast %170 : vector<1x32xf32> to vector<16x32xf32>
    %238 = arith.addf %236, %237 : vector<16x32xf32>
    %cst_91 = arith.constant dense<0.000000e+00> : vector<16x64xf32>
    %239 = tpu.matmul %238, %161, %cst_91 {dimension_numbers = #tpu.dot_dimension_numbers<[1], [0], [0], [1], [0, 0, 1, 1], [], []>} : vector<16x32xf32>, vector<32x64xf32>, vector<16x64xf32> -> vector<16x64xf32>
    %240 = vector.broadcast %163 : vector<1x64xf32> to vector<16x64xf32>
    %241 = arith.addf %239, %240 : vector<16x64xf32>
    %242 = arith.mulf %241, %241 : vector<16x64xf32>
    %243 = arith.mulf %241, %242 : vector<16x64xf32>
    %cst_92 = arith.constant 4.471500e-02 : f32
    %244 = vector.broadcast %cst_92 : f32 to vector<16x64xf32>
    %245 = arith.mulf %244, %243 : vector<16x64xf32>
    %246 = arith.addf %241, %245 : vector<16x64xf32>
    %cst_93 = arith.constant 0.797884583 : f32
    %247 = vector.broadcast %cst_93 : f32 to vector<16x64xf32>
    %248 = arith.mulf %247, %246 : vector<16x64xf32>
    %249 = math.tanh %248 : vector<16x64xf32>
    %cst_94 = arith.constant 1.000000e+00 : f32
    %250 = vector.broadcast %cst_94 : f32 to vector<16x64xf32>
    %251 = arith.addf %250, %249 : vector<16x64xf32>
    %cst_95 = arith.constant 5.000000e-01 : f32
    %252 = vector.broadcast %cst_95 : f32 to vector<16x64xf32>
    %253 = arith.mulf %252, %251 : vector<16x64xf32>
    %254 = arith.mulf %241, %253 : vector<16x64xf32>
    %cst_96 = arith.constant dense<0.000000e+00> : vector<16x32xf32>
    %255 = tpu.matmul %254, %165, %cst_96 {dimension_numbers = #tpu.dot_dimension_numbers<[1], [0], [0], [1], [0, 0, 1, 1], [], []>} : vector<16x64xf32>, vector<64x32xf32>, vector<16x32xf32> -> vector<16x32xf32>
    %256 = vector.broadcast %171 : vector<1x32xf32> to vector<16x32xf32>
    %257 = arith.addf %255, %256 : vector<16x32xf32>
    %258 = arith.addf %238, %257 : vector<16x32xf32>
    %cst_97 = arith.constant dense<0.000000e+00> : vector<16xf32>
    %259 = vector.multi_reduction <add>, %258, %cst_97 [1] : vector<16x32xf32> to vector<16xf32>
    %260 = vector.shape_cast %259 : vector<16xf32> to vector<16x1xf32>
    %cst_98 = arith.constant 3.200000e+01 : f32
    %261 = vector.broadcast %cst_98 : f32 to vector<16x1xf32>
    %262 = arith.divf %260, %261 : vector<16x1xf32>
    %263 = vector.broadcast %262 : vector<16x1xf32> to vector<16x32xf32>
    %264 = arith.subf %258, %263 : vector<16x32xf32>
    %265 = arith.mulf %264, %264 : vector<16x32xf32>
    %cst_99 = arith.constant dense<0.000000e+00> : vector<16xf32>
    %266 = vector.multi_reduction <add>, %265, %cst_99 [1] : vector<16x32xf32> to vector<16xf32>
    %267 = vector.shape_cast %266 : vector<16xf32> to vector<16x1xf32>
    %cst_100 = arith.constant 3.200000e+01 : f32
    %268 = vector.broadcast %cst_100 : f32 to vector<16x1xf32>
    %269 = arith.divf %267, %268 : vector<16x1xf32>
    %270 = vector.broadcast %262 : vector<16x1xf32> to vector<16x32xf32>
    %271 = arith.subf %258, %270 : vector<16x32xf32>
    %cst_101 = arith.constant 9.99999996E-13 : f32
    %272 = vector.broadcast %cst_101 : f32 to vector<16x1xf32>
    %273 = arith.addf %269, %272 : vector<16x1xf32>
    %274 = math.rsqrt %273 : vector<16x1xf32>
    %275 = vector.broadcast %274 : vector<16x1xf32> to vector<16x32xf32>
    %276 = arith.mulf %271, %275 : vector<16x32xf32>
    %277 = vector.broadcast %172 : vector<1x32xf32> to vector<16x32xf32>
    %278 = arith.mulf %276, %277 : vector<16x32xf32>
    %279 = vector.broadcast %173 : vector<1x32xf32> to vector<16x32xf32>
    %280 = arith.addf %278, %279 : vector<16x32xf32>
    %c0_102 = arith.constant 0 : index
    %c0_103 = arith.constant 0 : index
    %281 = vector.load %arg11[%c0_102, %c0_103] : memref<32x128xf32, #tpu.memory_space<vmem>>, vector<32x128xf32>
    %cst_104 = arith.constant dense<0.000000e+00> : vector<16x128xf32>
    %282 = tpu.matmul %280, %281, %cst_104 {dimension_numbers = #tpu.dot_dimension_numbers<[1], [0], [0], [1], [0, 0, 1, 1], [], []>} : vector<16x32xf32>, vector<32x128xf32>, vector<16x128xf32> -> vector<16x128xf32>
    %c0_105 = arith.constant 0 : index
    %c0_106 = arith.constant 0 : index
    %283 = vector.load %arg12[%c0_105, %c0_106] : memref<1x128xf32, #tpu.memory_space<vmem>>, vector<1x128xf32>
    %284 = vector.broadcast %283 : vector<1x128xf32> to vector<16x128xf32>
    %285 = arith.addf %282, %284 : vector<16x128xf32>
    %c0_107 = arith.constant 0 : index
    %c0_108 = arith.constant 0 : index
    %286 = vector.load %arg17[%c0_107, %c0_108] : memref<16x128xf32, #tpu.memory_space<vmem>>, vector<16x128xf32>
    tpu.vector_store %arg17[%c0_107, %c0_108], %285 {strides = array<i32>} : memref<16x128xf32, #tpu.memory_space<vmem>>, vector<16x128xf32>,
    %287 = vector.extract_strided_slice %285 {offsets = [0, 0], sizes = [16, 8], strides = [1, 1]} : vector<16x128xf32> to vector<16x8xf32>
    %cst_109 = arith.constant dense<0xFF800000> : vector<16xf32>
    %288 = vector.multi_reduction <maximumf>, %287, %cst_109 [1] : vector<16x8xf32> to vector<16xf32>
    %289 = vector.shape_cast %288 : vector<16xf32> to vector<16x1xf32>
    %290 = vector.broadcast %289 : vector<16x1xf32> to vector<16x8xf32>
    %291 = arith.subf %287, %290 : vector<16x8xf32>
    %292 = math.exp %291 : vector<16x8xf32>
    %cst_110 = arith.constant dense<0.000000e+00> : vector<16xf32>
    %293 = vector.multi_reduction <add>, %292, %cst_110 [1] : vector<16x8xf32> to vector<16xf32>
    %294 = vector.shape_cast %293 : vector<16xf32> to vector<16x1xf32>
    %295 = tpu.reciprocal %294 {approx = true} : vector<16x1xf32> -> vector<16x1xf32>
    %296 = vector.broadcast %295 : vector<16x1xf32> to vector<16x8xf32>
    %297 = arith.mulf %292, %296 : vector<16x8xf32>
    %298 = tpu.concatenate %280, %297 in 1 : vector<16x32xf32>, vector<16x8xf32> -> vector<16x40xf32>
    %c0_111 = arith.constant 0 : index
    %c0_112 = arith.constant 0 : index
    %299 = vector.load %arg14[%c0_111, %c0_112] : memref<3x40xf32, #tpu.memory_space<vmem>>, vector<3x40xf32>
    %c0_113 = arith.constant 0 : index
    %c0_114 = arith.constant 0 : index
    %300 = vector.load %arg13[%c0_113, %c0_114] : memref<40x40xf32, #tpu.memory_space<vmem>>, vector<40x40xf32>
    %cst_115 = arith.constant dense<0.000000e+00> : vector<16x40xf32>
    %301 = tpu.matmul %298, %300, %cst_115 {dimension_numbers = #tpu.dot_dimension_numbers<[1], [0], [0], [1], [0, 0, 1, 1], [], []>} : vector<16x40xf32>, vector<40x40xf32>, vector<16x40xf32> -> vector<16x40xf32>
    %302 = vector.extract_strided_slice %299 {offsets = [0, 0], sizes = [1, 40], strides = [1, 1]} : vector<3x40xf32> to vector<1x40xf32>
    %303 = vector.broadcast %302 : vector<1x40xf32> to vector<16x40xf32>
    %304 = arith.addf %301, %303 : vector<16x40xf32>
    %305 = math.tanh %304 : vector<16x40xf32>
    %306 = vector.extract_strided_slice %299 {offsets = [1, 0], sizes = [1, 40], strides = [1, 1]} : vector<3x40xf32> to vector<1x40xf32>
    %307 = vector.extract_strided_slice %299 {offsets = [2, 0], sizes = [1, 40], strides = [1, 1]} : vector<3x40xf32> to vector<1x40xf32>
    %cst_116 = arith.constant dense<0.000000e+00> : vector<16xf32>
    %308 = vector.multi_reduction <add>, %305, %cst_116 [1] : vector<16x40xf32> to vector<16xf32>
    %309 = vector.shape_cast %308 : vector<16xf32> to vector<16x1xf32>
    %cst_117 = arith.constant 4.000000e+01 : f32
    %310 = vector.broadcast %cst_117 : f32 to vector<16x1xf32>
    %311 = arith.divf %309, %310 : vector<16x1xf32>
    %312 = vector.broadcast %311 : vector<16x1xf32> to vector<16x40xf32>
    %313 = arith.subf %305, %312 : vector<16x40xf32>
    %314 = arith.mulf %313, %313 : vector<16x40xf32>
    %cst_118 = arith.constant dense<0.000000e+00> : vector<16xf32>
    %315 = vector.multi_reduction <add>, %314, %cst_118 [1] : vector<16x40xf32> to vector<16xf32>
    %316 = vector.shape_cast %315 : vector<16xf32> to vector<16x1xf32>
    %cst_119 = arith.constant 4.000000e+01 : f32
    %317 = vector.broadcast %cst_119 : f32 to vector<16x1xf32>
    %318 = arith.divf %316, %317 : vector<16x1xf32>
    %319 = vector.broadcast %311 : vector<16x1xf32> to vector<16x40xf32>
    %320 = arith.subf %305, %319 : vector<16x40xf32>
    %cst_120 = arith.constant 9.99999996E-13 : f32
    %321 = vector.broadcast %cst_120 : f32 to vector<16x1xf32>
    %322 = arith.addf %318, %321 : vector<16x1xf32>
    %323 = math.rsqrt %322 : vector<16x1xf32>
    %324 = vector.broadcast %323 : vector<16x1xf32> to vector<16x40xf32>
    %325 = arith.mulf %320, %324 : vector<16x40xf32>
    %326 = vector.broadcast %306 : vector<1x40xf32> to vector<16x40xf32>
    %327 = arith.mulf %325, %326 : vector<16x40xf32>
    %328 = vector.broadcast %307 : vector<1x40xf32> to vector<16x40xf32>
    %329 = arith.addf %327, %328 : vector<16x40xf32>
    %c0_121 = arith.constant 0 : index
    %c0_122 = arith.constant 0 : index
    %330 = vector.load %arg15[%c0_121, %c0_122] : memref<40x128xf32, #tpu.memory_space<vmem>>, vector<40x128xf32>
    %cst_123 = arith.constant dense<0.000000e+00> : vector<16x128xf32>
    %331 = tpu.matmul %329, %330, %cst_123 {dimension_numbers = #tpu.dot_dimension_numbers<[1], [0], [0], [1], [0, 0, 1, 1], [], []>} : vector<16x40xf32>, vector<40x128xf32>, vector<16x128xf32> -> vector<16x128xf32>
    %c0_124 = arith.constant 0 : index
    %c0_125 = arith.constant 0 : index
    %332 = vector.load %arg16[%c0_124, %c0_125] : memref<1x128xf32, #tpu.memory_space<vmem>>, vector<1x128xf32>
    %333 = vector.broadcast %332 : vector<1x128xf32> to vector<16x128xf32>
    %334 = arith.addf %331, %333 : vector<16x128xf32>
    %c0_126 = arith.constant 0 : index
    %c0_127 = arith.constant 0 : index
    %335 = vector.load %arg18[%c0_126, %c0_127] : memref<16x128xf32, #tpu.memory_space<vmem>>, vector<16x128xf32>
    tpu.vector_store %arg18[%c0_126, %c0_127], %334 {strides = array<i32>} : memref<16x128xf32, #tpu.memory_space<vmem>>, vector<16x128xf32>,
    return
  }
  func.func @transform_0(%arg0: i32) -> (i32, i32) {
    %c0_i32 = arith.constant 0 : i32
    %c0_i32_0 = arith.constant 0 : i32
    %c0_i32_1 = arith.constant 0 : i32
    return %c0_i32, %c0_i32_0 : i32, i32
  }
  func.func @transform_1(%arg0: i32) -> (i32, i32) {
    %c0_i32 = arith.constant 0 : i32
    %c0_i32_0 = arith.constant 0 : i32
    %c0_i32_1 = arith.constant 0 : i32
    return %c0_i32, %c0_i32_0 : i32, i32
  }
  func.func @transform_2(%arg0: i32) -> (i32, i32) {
    %c0_i32 = arith.constant 0 : i32
    %c0_i32_0 = arith.constant 0 : i32
    %c0_i32_1 = arith.constant 0 : i32
    return %c0_i32, %c0_i32_0 : i32, i32
  }
  func.func @transform_3(%arg0: i32) -> (i32, i32, i32) {
    %c0_i32 = arith.constant 0 : i32
    %c0_i32_0 = arith.constant 0 : i32
    %c0_i32_1 = arith.constant 0 : i32
    %c0_i32_2 = arith.constant 0 : i32
    return %c0_i32, %c0_i32_0, %c0_i32_1 : i32, i32, i32
  }
  func.func @transform_4(%arg0: i32) -> (i32, i32, i32) {
    %c0_i32 = arith.constant 0 : i32
    %c0_i32_0 = arith.constant 0 : i32
    %c0_i32_1 = arith.constant 0 : i32
    %c0_i32_2 = arith.constant 0 : i32
    return %c0_i32, %c0_i32_0, %c0_i32_1 : i32, i32, i32
  }
  func.func @transform_5(%arg0: i32) -> (i32, i32, i32) {
    %c0_i32 = arith.constant 0 : i32
    %c0_i32_0 = arith.constant 0 : i32
    %c0_i32_1 = arith.constant 0 : i32
    %c0_i32_2 = arith.constant 0 : i32
    return %c0_i32, %c0_i32_0, %c0_i32_1 : i32, i32, i32
  }
  func.func @transform_6(%arg0: i32) -> (i32, i32, i32) {
    %c0_i32 = arith.constant 0 : i32
    %c0_i32_0 = arith.constant 0 : i32
    %c0_i32_1 = arith.constant 0 : i32
    %c0_i32_2 = arith.constant 0 : i32
    return %c0_i32, %c0_i32_0, %c0_i32_1 : i32, i32, i32
  }
  func.func @transform_7(%arg0: i32) -> (i32, i32, i32) {
    %c0_i32 = arith.constant 0 : i32
    %c0_i32_0 = arith.constant 0 : i32
    %c0_i32_1 = arith.constant 0 : i32
    %c0_i32_2 = arith.constant 0 : i32
    return %c0_i32, %c0_i32_0, %c0_i32_1 : i32, i32, i32
  }
  func.func @transform_8(%arg0: i32) -> (i32, i32, i32) {
    %c0_i32 = arith.constant 0 : i32
    %c0_i32_0 = arith.constant 0 : i32
    %c0_i32_1 = arith.constant 0 : i32
    %c0_i32_2 = arith.constant 0 : i32
    return %c0_i32, %c0_i32_0, %c0_i32_1 : i32, i32, i32
  }
  func.func @transform_9(%arg0: i32) -> (i32, i32, i32) {
    %c0_i32 = arith.constant 0 : i32
    %c0_i32_0 = arith.constant 0 : i32
    %c0_i32_1 = arith.constant 0 : i32
    %c0_i32_2 = arith.constant 0 : i32
    return %c0_i32, %c0_i32_0, %c0_i32_1 : i32, i32, i32
  }
  func.func @transform_10(%arg0: i32) -> (i32, i32) {
    %c0_i32 = arith.constant 0 : i32
    %c0_i32_0 = arith.constant 0 : i32
    %c0_i32_1 = arith.constant 0 : i32
    return %c0_i32, %c0_i32_0 : i32, i32
  }
  func.func @transform_11(%arg0: i32) -> (i32, i32) {
    %c0_i32 = arith.constant 0 : i32
    %c0_i32_0 = arith.constant 0 : i32
    %c0_i32_1 = arith.constant 0 : i32
    return %c0_i32, %c0_i32_0 : i32, i32
  }
  func.func @transform_12(%arg0: i32) -> (i32, i32) {
    %c0_i32 = arith.constant 0 : i32
    %c0_i32_0 = arith.constant 0 : i32
    %c0_i32_1 = arith.constant 0 : i32
    return %c0_i32, %c0_i32_0 : i32, i32
  }
  func.func @transform_13(%arg0: i32) -> (i32, i32) {
    %c0_i32 = arith.constant 0 : i32
    %c0_i32_0 = arith.constant 0 : i32
    %c0_i32_1 = arith.constant 0 : i32
    return %c0_i32, %c0_i32_0 : i32, i32
  }
  func.func @transform_14(%arg0: i32) -> (i32, i32) {
    %c0_i32 = arith.constant 0 : i32
    %c0_i32_0 = arith.constant 0 : i32
    %c0_i32_1 = arith.constant 0 : i32
    return %c0_i32, %c0_i32_0 : i32, i32
  }
  func.func @transform_15(%arg0: i32) -> (i32, i32) {
    %c0_i32 = arith.constant 0 : i32
    %c0_i32_0 = arith.constant 0 : i32
    %c0_i32_1 = arith.constant 0 : i32
    return %c0_i32, %c0_i32_0 : i32, i32
  }
  func.func @transform_16(%arg0: i32) -> (i32, i32) {
    %c0_i32 = arith.constant 0 : i32
    %c0_i32_0 = arith.constant 0 : i32
    %c0_i32_1 = arith.constant 0 : i32
    return %c0_i32, %c0_i32_0 : i32, i32
  }
  func.func @transform_17(%arg0: i32) -> (i32, i32) {
    %c0_i32 = arith.constant 0 : i32
    %c0_i32_0 = arith.constant 0 : i32
    %c0_i32_1 = arith.constant 0 : i32
    return %c0_i32, %c0_i32_0 : i32, i32
  }
}

</mosaic_0001>

<llo_original>
// kernel: bert_span_for_ner_forward.1
$region0: #{bert_span_for_ner_forward.1}
  #allocation0 [shape = 'u32[]', space=smem, size = 0x4, offset = 0x4, fixed_abs, tag = 'smem constant byte address 0x4 - core index']
  #allocation1 [shape = 'u32[72,128]{1,0:T(1,128)}', space=vmem, size = 0x9000, scoped, tag = 'internal scratch']
  %s0 = inlined_call_operand.vmem [shape: f32[16,32], index: 0, kind: input, shape index: {}]
  %s1 = inlined_call_operand.vmem [shape: f32[16,16], index: 1, kind: input, shape index: {}]
  %s2 = inlined_call_operand.vmem [shape: f32[2,32], index: 2, kind: input, shape index: {}]
  %s3 = inlined_call_operand.vmem [shape: f32[2,32,96], index: 3, kind: input, shape index: {}]
  %s4 = inlined_call_operand.vmem [shape: f32[2,1,96], index: 4, kind: input, shape index: {}]
  %s5 = inlined_call_operand.vmem [shape: f32[2,32,32], index: 5, kind: input, shape index: {}]
  %s6 = inlined_call_operand.vmem [shape: f32[2,32,64], index: 6, kind: input, shape index: {}]
  %s7 = inlined_call_operand.vmem [shape: f32[2,1,64], index: 7, kind: input, shape index: {}]
  %s8 = inlined_call_operand.vmem [shape: f32[2,64,32], index: 8, kind: input, shape index: {}]
  %s9 = inlined_call_operand.vmem [shape: f32[2,6,32], index: 9, kind: input, shape index: {}]
  %s10 = inlined_call_operand.vmem [shape: f32[32,128], index: 10, kind: input, shape index: {}]
  %s11 = inlined_call_operand.vmem [shape: f32[1,128], index: 11, kind: input, shape index: {}]
  %s12 = inlined_call_operand.vmem [shape: f32[40,40], index: 12, kind: input, shape index: {}]
  %s13 = inlined_call_operand.vmem [shape: f32[3,40], index: 13, kind: input, shape index: {}]
  %s14 = inlined_call_operand.vmem [shape: f32[40,128], index: 14, kind: input, shape index: {}]
  %s15 = inlined_call_operand.vmem [shape: f32[1,128], index: 15, kind: input, shape index: {}]
  %s16 = inlined_call_operand.vmem [shape: f32[16,128], index: 16, kind: output, shape index: {0}]
  %s17 = inlined_call_operand.vmem [shape: f32[16,128], index: 17, kind: output, shape index: {1}]
  %18 = xla_tuple %s16, %s17
  %s19 = sld [smem:[#allocation0]]
  $region82: #{bert_span_for_ner_forward.1} parent=0
    _
  %s21 = ssub.s32 1, %s19
  %s22 = scalar_select 0, %s21, %s19
  // Predicated region
  $region2: #{bert_span_for_ner_forward.1} parent=0 // pred_check
    _
  $region3: #{bert_span_for_ner_forward.1} parent=0 // pred_check_branch
    %24 = sbr.rel (0) target = $region5
  $region4: #{bert_span_for_ner_forward.1} parent=0 // pred_region
    _
  $region5: #{bert_span_for_ner_forward.1} parent=0 // pred_fallthru
    _
  // Predicated region
  $region6: #{bert_span_for_ner_forward.1} parent=0 // pred_check
    _
  $region7: #{bert_span_for_ner_forward.1} parent=0 // pred_check_branch
    %26 = sbr.rel (0) target = $region9
  $region8: #{bert_span_for_ner_forward.1} parent=0 // pred_region
    _
  $region9: #{bert_span_for_ner_forward.1} parent=0 // pred_fallthru
    _
  // Predicated region
  $region10: #{bert_span_for_ner_forward.1} parent=0 // pred_check
    _
  $region11: #{bert_span_for_ner_forward.1} parent=0 // pred_check_branch
    %28 = sbr.rel (0) target = $region13
  $region12: #{bert_span_for_ner_forward.1} parent=0 // pred_region
    _
  $region13: #{bert_span_for_ner_forward.1} parent=0 // pred_fallthru
    _
  // Predicated region
  $region14: #{bert_span_for_ner_forward.1} parent=0 // pred_check
    _
  $region15: #{bert_span_for_ner_forward.1} parent=0 // pred_check_branch
    %30 = sbr.rel (0) target = $region17
  $region16: #{bert_span_for_ner_forward.1} parent=0 // pred_region
    _
  $region17: #{bert_span_for_ner_forward.1} parent=0 // pred_fallthru
    _
  // Predicated region
  $region18: #{bert_span_for_ner_forward.1} parent=0 // pred_check
    _
  $region19: #{bert_span_for_ner_forward.1} parent=0 // pred_check_branch
    %32 = sbr.rel (0) target = $region21
  $region20: #{bert_span_for_ner_forward.1} parent=0 // pred_region
    _
  $region21: #{bert_span_for_ner_forward.1} parent=0 // pred_fallthru
    _
  // Predicated region
  $region22: #{bert_span_for_ner_forward.1} parent=0 // pred_check
    _
  $region23: #{bert_span_for_ner_forward.1} parent=0 // pred_check_branch
    %34 = sbr.rel (0) target = $region25
  $region24: #{bert_span_for_ner_forward.1} parent=0 // pred_region
    _
  $region25: #{bert_span_for_ner_forward.1} parent=0 // pred_fallthru
    _
  // Predicated region
  $region26: #{bert_span_for_ner_forward.1} parent=0 // pred_check
    _
  $region27: #{bert_span_for_ner_forward.1} parent=0 // pred_check_branch
    %36 = sbr.rel (0) target = $region29
  $region28: #{bert_span_for_ner_forward.1} parent=0 // pred_region
    _
  $region29: #{bert_span_for_ner_forward.1} parent=0 // pred_fallthru
    _
  // Predicated region
  $region30: #{bert_span_for_ner_forward.1} parent=0 // pred_check
    _
  $region31: #{bert_span_for_ner_forward.1} parent=0 // pred_check_branch
    %38 = sbr.rel (0) target = $region33
  $region32: #{bert_span_for_ner_forward.1} parent=0 // pred_region
    _
  $region33: #{bert_span_for_ner_forward.1} parent=0 // pred_fallthru
    _
  // Predicated region
  $region34: #{bert_span_for_ner_forward.1} parent=0 // pred_check
    _
  $region35: #{bert_span_for_ner_forward.1} parent=0 // pred_check_branch
    %40 = sbr.rel (0) target = $region37
  $region36: #{bert_span_for_ner_forward.1} parent=0 // pred_region
    _
  $region37: #{bert_span_for_ner_forward.1} parent=0 // pred_fallthru
    _
  // Predicated region
  $region38: #{bert_span_for_ner_forward.1} parent=0 // pred_check
    _
  $region39: #{bert_span_for_ner_forward.1} parent=0 // pred_check_branch
    %42 = sbr.rel (0) target = $region41
  $region40: #{bert_span_for_ner_forward.1} parent=0 // pred_region
    _
  $region41: #{bert_span_for_ner_forward.1} parent=0 // pred_fallthru
    _
  // Predicated region
  $region42: #{bert_span_for_ner_forward.1} parent=0 // pred_check
    _
  $region43: #{bert_span_for_ner_forward.1} parent=0 // pred_check_branch
    %44 = sbr.rel (0) target = $region45
  $region44: #{bert_span_for_ner_forward.1} parent=0 // pred_region
    _
  $region45: #{bert_span_for_ner_forward.1} parent=0 // pred_fallthru
    _
  // Predicated region
  $region46: #{bert_span_for_ner_forward.1} parent=0 // pred_check
    _
  $region47: #{bert_span_for_ner_forward.1} parent=0 // pred_check_branch
    %46 = sbr.rel (0) target = $region49
  $region48: #{bert_span_for_ner_forward.1} parent=0 // pred_region
    _
  $region49: #{bert_span_for_ner_forward.1} parent=0 // pred_fallthru
    _
  // Predicated region
  $region50: #{bert_span_for_ner_forward.1} parent=0 // pred_check
    _
  $region51: #{bert_span_for_ner_forward.1} parent=0 // pred_check_branch
    %48 = sbr.rel (0) target = $region53
  $region52: #{bert_span_for_ner_forward.1} parent=0 // pred_region
    _
  $region53: #{bert_span_for_ner_forward.1} parent=0 // pred_fallthru
    _
  // Predicated region
  $region54: #{bert_span_for_ner_forward.1} parent=0 // pred_check
    _
  $region55: #{bert_span_for_ner_forward.1} parent=0 // pred_check_branch
    %50 = sbr.rel (0) target = $region57
  $region56: #{bert_span_for_ner_forward.1} parent=0 // pred_region
    _
  $region57: #{bert_span_for_ner_forward.1} parent=0 // pred_fallthru
    _
  // Predicated region
  $region58: #{bert_span_for_ner_forward.1} parent=0 // pred_check
    _
  $region59: #{bert_span_for_ner_forward.1} parent=0 // pred_check_branch
    %52 = sbr.rel (0) target = $region61
  $region60: #{bert_span_for_ner_forward.1} parent=0 // pred_region
    _
  $region61: #{bert_span_for_ner_forward.1} parent=0 // pred_fallthru
    _
  // Predicated region
  $region62: #{bert_span_for_ner_forward.1} parent=0 // pred_check
    _
  $region63: #{bert_span_for_ner_forward.1} parent=0 // pred_check_branch
    %54 = sbr.rel (0) target = $region65
  $region64: #{bert_span_for_ner_forward.1} parent=0 // pred_region
    _
  $region65: #{bert_span_for_ner_forward.1} parent=0 // pred_fallthru
    _
  %v55 = vld [vmem:[%s0] sm:$0xff]
  %v56 = vld [vmem:[%s0 + $0x8] sm:$0xff]
  %v57 = vld [vmem:[%s1] sm:$0xff]
  %v58 = vld [vmem:[%s1 + $0x8] sm:$0xff]
  %v59 = vld [vmem:[%s2] sm:$0x3]
  %vm60 = vcmask 261120
  %v61 = vsel %vm60, %v55, 0.0
  %62 = vadd.xlane.f32.xlu0 %v61
  %v63 = vpop.xlane.xlu0 %62
  %v64 = vsel %vm60, %v56, 0.0
  %65 = vadd.xlane.f32.xlu0 %v64
  %v66 = vpop.xlane.xlu0 %65
  %v67 = vrcp.pop 32.0
  %v68 = vmul.f32 32.0, %v67
  %v69 = vsub.f32 1.0, %v68
  %v70 = vmul.f32 %v67, %v69
  %v71 = vadd.f32 %v67, %v70
  %vm72 = vweird.f32 %v67
  %v73 = vsel %vm72, %v67, %v71
  %v74 = vmul.f32 %v63, %v73
  %v75 = vmul.f32 %v66, %v73
  %v76 = vsub.f32 %v55, %v74
  %v77 = vsub.f32 %v56, %v75
  %v78 = vmul.f32 %v76, %v76
  %v79 = vmul.f32 %v77, %v77
  %v80 = vsel %vm60, %v78, 0.0
  %81 = vadd.xlane.f32.xlu0 %v80
  %v82 = vpop.xlane.xlu0 %81
  %v83 = vsel %vm60, %v79, 0.0
  %84 = vadd.xlane.f32.xlu0 %v83
  %v85 = vpop.xlane.xlu0 %84
  %v86 = vmul.f32 %v82, %v73
  %v87 = vmul.f32 %v85, %v73
  %v88 = vadd.f32 %v86, 1e-12
  %v89 = vadd.f32 %v87, 1e-12
  %v90 = vrsqrt.pop %v88
  %v91 = vmul.f32 %v90, %v88
  %v92 = vmul.f32 %v91, %v90
  %v93 = vmul.f32 0.5, %v92
  %v94 = vsub.f32 1.5, %v93
  %v95 = vmul.f32 %v90, %v94
  %vm96 = vweird.f32 %v88
  %vm97 = vweird.f32 %v90
  %vm98 = vmor %vm96, %vm97
  %v99 = vsel %vm98, %v90, %v95
  %v100 = vrsqrt.pop %v89
  %v101 = vmul.f32 %v100, %v89
  %v102 = vmul.f32 %v101, %v100
  %v103 = vmul.f32 0.5, %v102
  %v104 = vsub.f32 1.5, %v103
  %v105 = vmul.f32 %v100, %v104
  %vm106 = vweird.f32 %v89
  %vm107 = vweird.f32 %v100
  %vm108 = vmor %vm106, %vm107
  %v109 = vsel %vm108, %v100, %v105
  %v110 = vmul.f32 %v76, %v99
  %v111 = vmul.f32 %v77, %v109
  %v112 = vperm.slane %v59, 0
  %v113 = vmul.f32 %v110, %v112
  %v114 = vmul.f32 %v111, %v112
  %v115 = vperm.slane %v59, 1
  %v116 = vadd.f32 %v113, %v115
  %v117 = vadd.f32 %v114, %v115
  %v118 = vld [vmem:[%s3] sm:$0xff]
  %v119 = vld [vmem:[%s3 + $0x8] sm:$0xff]
  %v120 = vld [vmem:[%s3 + $0x10] sm:$0xff]
  %v121 = vld [vmem:[%s3 + $0x18] sm:$0xff]
  %v122 = vld [vmem:[%s4] sm:$0x1]
  %v123 = vld [vmem:[%s5] sm:$0xff]
  %v124 = vld [vmem:[%s5 + $0x8] sm:$0xff]
  %v125 = vld [vmem:[%s5 + $0x10] sm:$0xff]
  %v126 = vld [vmem:[%s5 + $0x18] sm:$0xff]
  %v127 = vld [vmem:[%s6] sm:$0xff]
  %v128 = vld [vmem:[%s6 + $0x8] sm:$0xff]
  %v129 = vld [vmem:[%s6 + $0x10] sm:$0xff]
  %v130 = vld [vmem:[%s6 + $0x18] sm:$0xff]
  %v131 = vld [vmem:[%s7] sm:$0x1]
  %v132 = vld [vmem:[%s8] sm:$0xff]
  %v133 = vld [vmem:[%s8 + $0x8] sm:$0xff]
  %v134 = vld [vmem:[%s8 + $0x10] sm:$0xff]
  %v135 = vld [vmem:[%s8 + $0x18] sm:$0xff]
  %v136 = vld [vmem:[%s8 + $0x20] sm:$0xff]
  %v137 = vld [vmem:[%s8 + $0x28] sm:$0xff]
  %v138 = vld [vmem:[%s8 + $0x30] sm:$0xff]
  %v139 = vld [vmem:[%s8 + $0x38] sm:$0xff]
  %v140 = vld [vmem:[%s9] sm:$0x3f]
  %v142 = vperm.slane %v122, 0
  %v145 = vsel %vm60, %v116, 0
  %v148 = vsel %vm60, %v117, 0
  %150 = vmatpush.msra.mxu0 0.0
  %151 = vmatpush.msra.mxu0 0.0
  %152 = vmatpush.msra.mxu0 0.0
  %153 = vmatpush.msra.mxu0 0.0
  %154 = vmatpush.msra.mxu0 0.0
  %155 = vmatpush.msra.mxu0 0.0
  %156 = vmatpush.msra.mxu0 0.0
  %157 = vmatpush.msra.mxu0 0.0
  %158 = vmatpush.msra.mxu0 0.0
  %159 = vmatpush.msra.mxu0 0.0
  %160 = vmatpush.msra.mxu0 0.0
  %161 = vmatpush.msra.mxu0 0.0
  %162 = vmatpush.msra.mxu0 %v121
  %163 = vmatpush.msra.mxu0 %v120
  %164 = vmatpush.msra.mxu0 %v119
  %165 = vmatpush.msra.mxu0 %v118
  %166 = vmatmul.f32.gmra.mxu0 %v145
  %v167 = vpop.f32.mrf.mxu0
  %v168 = vadd.f32 %v142, %v167
  %169 = vmatmul.f32.gmra.mxu0 %v148
  %v170 = vpop.f32.mrf.mxu0
  %v171 = vadd.f32 %v142, %v170
  %172 = vdwg.mxu0
  %175 = vrot.lane.b32.xlu0 %v168, 96
  %v176 = vpop.permute.xlu0 %175
  %177 = vrot.lane.b32.xlu0 %v171, 96
  %v178 = vpop.permute.xlu0 %177
  %vm179 = vcmask 130048
  %v180 = vsel %vm179, %v168, 0
  %v182 = vsel %vm179, %v171, 0
  %v184 = vsel %vm179, %v176, 0
  %v186 = vsel %vm179, %v178, 0
  %188 = vmatpush.xpose.msra.mxu0 0.0
  %189 = vmatpush.xpose.msra.mxu0 0.0
  %190 = vmatpush.xpose.msra.mxu0 0.0
  %191 = vmatpush.xpose.msra.mxu0 0.0
  %192 = vmatpush.xpose.msra.mxu0 0.0
  %193 = vmatpush.xpose.msra.mxu0 0.0
  %194 = vmatpush.xpose.msra.mxu0 0.0
  %195 = vmatpush.xpose.msra.mxu0 0.0
  %196 = vmatpush.xpose.msra.mxu0 0.0
  %197 = vmatpush.xpose.msra.mxu0 0.0
  %198 = vmatpush.xpose.msra.mxu0 0.0
  %199 = vmatpush.xpose.msra.mxu0 0.0
  %200 = vmatpush.xpose.msra.mxu0 0.0
  %201 = vmatpush.xpose.msra.mxu0 0.0
  %202 = vmatpush.xpose.msra.mxu0 %v186
  %203 = vmatpush.xpose.msra.mxu0 %v184
  %204 = vmatmul.f32.gmra.mxu0 %v180
  %v205 = vpop.f32.mrf.mxu0
  %v206 = vadd.f32 %v57, %v205
  %207 = vmatmul.f32.gmra.mxu0 %v182
  %v208 = vpop.f32.mrf.mxu0
  %v209 = vadd.f32 %v58, %v208
  %210 = vdwg.mxu0
  %v211 = vsel %vm179, %v206, -inf
  %212 = vmax.xlane.f32.xlu0 %v211
  %v213 = vpop.xlane.xlu0 %212
  %v214 = vsel %vm179, %v209, -inf
  %215 = vmax.xlane.f32.xlu0 %v214
  %v216 = vpop.xlane.xlu0 %215
  %v217 = vsub.f32 %v206, %v213
  %v218 = vsub.f32 %v209, %v216
  %v219 = vmul.f32 %v217, 1.442695
  %v220 = vpow.pop %v219
  %v221 = vmul.f32 %v218, 1.442695
  %v222 = vpow.pop %v221
  %v223 = vsel %vm179, %v220, 0.0
  %224 = vadd.xlane.f32.xlu0 %v223
  %v225 = vpop.xlane.xlu0 %224
  %v226 = vsel %vm179, %v222, 0.0
  %227 = vadd.xlane.f32.xlu0 %v226
  %v228 = vpop.xlane.xlu0 %227
  %v229 = vrcp.pop %v225
  %v230 = vrcp.pop %v228
  %v231 = vmul.f32 %v220, %v229
  %v232 = vmul.f32 %v222, %v230
  %233 = vrot.lane.b32.xlu0 %v168, 64
  %v234 = vpop.permute.xlu0 %233
  %235 = vrot.lane.b32.xlu0 %v171, 64
  %v236 = vpop.permute.xlu0 %235
  %v240 = vsel %vm179, %v231, 0
  %v243 = vsel %vm179, %v232, 0
  %245 = vmatpush.msra.mxu0 0.0
  %246 = vmatpush.msra.mxu0 0.0
  %247 = vmatpush.msra.mxu0 0.0
  %248 = vmatpush.msra.mxu0 0.0
  %249 = vmatpush.msra.mxu0 0.0
  %250 = vmatpush.msra.mxu0 0.0
  %251 = vmatpush.msra.mxu0 0.0
  %252 = vmatpush.msra.mxu0 0.0
  %253 = vmatpush.msra.mxu0 0.0
  %254 = vmatpush.msra.mxu0 0.0
  %255 = vmatpush.msra.mxu0 0.0
  %256 = vmatpush.msra.mxu0 0.0
  %257 = vmatpush.msra.mxu0 0.0
  %258 = vmatpush.msra.mxu0 0.0
  %259 = vmatpush.msra.mxu0 %v236
  %260 = vmatpush.msra.mxu0 %v234
  %261 = vmatmul.f32.gmra.mxu0 %v240
  %v262 = vpop.f32.mrf.mxu0
  %v263 = vadd.f32 0.0, %v262
  %264 = vmatmul.f32.gmra.mxu0 %v243
  %v265 = vpop.f32.mrf.mxu0
  %v266 = vadd.f32 0.0, %v265
  %267 = vdwg.mxu0
  %268 = vrot.lane.b32.xlu0 %v168, 112
  %v269 = vpop.permute.xlu0 %268
  %270 = vrot.lane.b32.xlu0 %v171, 112
  %v271 = vpop.permute.xlu0 %270
  %272 = vrot.lane.b32.xlu0 %v168, 80
  %v273 = vpop.permute.xlu0 %272
  %274 = vrot.lane.b32.xlu0 %v171, 80
  %v275 = vpop.permute.xlu0 %274
  %v276 = vsel %vm179, %v269, 0
  %v278 = vsel %vm179, %v271, 0
  %v280 = vsel %vm179, %v273, 0
  %v282 = vsel %vm179, %v275, 0
  %284 = vmatpush.xpose.msra.mxu0 0.0
  %285 = vmatpush.xpose.msra.mxu0 0.0
  %286 = vmatpush.xpose.msra.mxu0 0.0
  %287 = vmatpush.xpose.msra.mxu0 0.0
  %288 = vmatpush.xpose.msra.mxu0 0.0
  %289 = vmatpush.xpose.msra.mxu0 0.0
  %290 = vmatpush.xpose.msra.mxu0 0.0
  %291 = vmatpush.xpose.msra.mxu0 0.0
  %292 = vmatpush.xpose.msra.mxu0 0.0
  %293 = vmatpush.xpose.msra.mxu0 0.0
  %294 = vmatpush.xpose.msra.mxu0 0.0
  %295 = vmatpush.xpose.msra.mxu0 0.0
  %296 = vmatpush.xpose.msra.mxu0 0.0
  %297 = vmatpush.xpose.msra.mxu0 0.0
  %298 = vmatpush.xpose.msra.mxu0 %v282
  %299 = vmatpush.xpose.msra.mxu0 %v280
  %300 = vmatmul.f32.gmra.mxu0 %v276
  %v301 = vpop.f32.mrf.mxu0
  %v302 = vadd.f32 %v57, %v301
  %303 = vmatmul.f32.gmra.mxu0 %v278
  %v304 = vpop.f32.mrf.mxu0
  %v305 = vadd.f32 %v58, %v304
  %306 = vdwg.mxu0
  %v307 = vsel %vm179, %v302, -inf
  %308 = vmax.xlane.f32.xlu0 %v307
  %v309 = vpop.xlane.xlu0 %308
  %v310 = vsel %vm179, %v305, -inf
  %311 = vmax.xlane.f32.xlu0 %v310
  %v312 = vpop.xlane.xlu0 %311
  %v313 = vsub.f32 %v302, %v309
  %v314 = vsub.f32 %v305, %v312
  %v315 = vmul.f32 %v313, 1.442695
  %v316 = vpow.pop %v315
  %v317 = vmul.f32 %v314, 1.442695
  %v318 = vpow.pop %v317
  %v319 = vsel %vm179, %v316, 0.0
  %320 = vadd.xlane.f32.xlu0 %v319
  %v321 = vpop.xlane.xlu0 %320
  %v322 = vsel %vm179, %v318, 0.0
  %323 = vadd.xlane.f32.xlu0 %v322
  %v324 = vpop.xlane.xlu0 %323
  %v325 = vrcp.pop %v321
  %v326 = vrcp.pop %v324
  %v327 = vmul.f32 %v316, %v325
  %v328 = vmul.f32 %v318, %v326
  %329 = vrot.lane.b32.xlu0 %v168, 48
  %v330 = vpop.permute.xlu0 %329
  %331 = vrot.lane.b32.xlu0 %v171, 48
  %v332 = vpop.permute.xlu0 %331
  %v336 = vsel %vm179, %v327, 0
  %v339 = vsel %vm179, %v328, 0
  %341 = vmatpush.msra.mxu0 0.0
  %342 = vmatpush.msra.mxu0 0.0
  %343 = vmatpush.msra.mxu0 0.0
  %344 = vmatpush.msra.mxu0 0.0
  %345 = vmatpush.msra.mxu0 0.0
  %346 = vmatpush.msra.mxu0 0.0
  %347 = vmatpush.msra.mxu0 0.0
  %348 = vmatpush.msra.mxu0 0.0
  %349 = vmatpush.msra.mxu0 0.0
  %350 = vmatpush.msra.mxu0 0.0
  %351 = vmatpush.msra.mxu0 0.0
  %352 = vmatpush.msra.mxu0 0.0
  %353 = vmatpush.msra.mxu0 0.0
  %354 = vmatpush.msra.mxu0 0.0
  %355 = vmatpush.msra.mxu0 %v332
  %356 = vmatpush.msra.mxu0 %v330
  %357 = vmatmul.f32.gmra.mxu0 %v336
  %v358 = vpop.f32.mrf.mxu0
  %v359 = vadd.f32 0.0, %v358
  %360 = vmatmul.f32.gmra.mxu0 %v339
  %v361 = vpop.f32.mrf.mxu0
  %v362 = vadd.f32 0.0, %v361
  %363 = vdwg.mxu0
  %366 = vrot.lane.b32.xlu0 %v359, 16
  %v367 = vpop.permute.xlu0 %366
  %368 = vrot.lane.b32.xlu0 %v362, 16
  %v369 = vpop.permute.xlu0 %368
  %v372 = vsel %vm179, %v263, %v367
  %v373 = vsel %vm179, %v266, %v369
  %v374 = vperm.slane %v140, 0
  %v376 = vsel %vm60, %v372, 0
  %v379 = vsel %vm60, %v373, 0
  %381 = vmatpush.msra.mxu0 0.0
  %382 = vmatpush.msra.mxu0 0.0
  %383 = vmatpush.msra.mxu0 0.0
  %384 = vmatpush.msra.mxu0 0.0
  %385 = vmatpush.msra.mxu0 0.0
  %386 = vmatpush.msra.mxu0 0.0
  %387 = vmatpush.msra.mxu0 0.0
  %388 = vmatpush.msra.mxu0 0.0
  %389 = vmatpush.msra.mxu0 0.0
  %390 = vmatpush.msra.mxu0 0.0
  %391 = vmatpush.msra.mxu0 0.0
  %392 = vmatpush.msra.mxu0 0.0
  %393 = vmatpush.msra.mxu0 %v126
  %394 = vmatpush.msra.mxu0 %v125
  %395 = vmatpush.msra.mxu0 %v124
  %396 = vmatpush.msra.mxu0 %v123
  %397 = vmatmul.f32.gmra.mxu0 %v376
  %v398 = vpop.f32.mrf.mxu0
  %v399 = vadd.f32 %v374, %v398
  %400 = vmatmul.f32.gmra.mxu0 %v379
  %v401 = vpop.f32.mrf.mxu0
  %v402 = vadd.f32 %v374, %v401
  %403 = vdwg.mxu0
  %v404 = vadd.f32 %v116, %v399
  %v405 = vadd.f32 %v117, %v402
  %v406 = vsel %vm60, %v404, 0.0
  %407 = vadd.xlane.f32.xlu0 %v406
  %v408 = vpop.xlane.xlu0 %407
  %v409 = vsel %vm60, %v405, 0.0
  %410 = vadd.xlane.f32.xlu0 %v409
  %v411 = vpop.xlane.xlu0 %410
  %v412 = vmul.f32 %v408, %v73
  %v413 = vmul.f32 %v411, %v73
  %v414 = vsub.f32 %v404, %v412
  %v415 = vsub.f32 %v405, %v413
  %v416 = vmul.f32 %v414, %v414
  %v417 = vmul.f32 %v415, %v415
  %v418 = vsel %vm60, %v416, 0.0
  %419 = vadd.xlane.f32.xlu0 %v418
  %v420 = vpop.xlane.xlu0 %419
  %v421 = vsel %vm60, %v417, 0.0
  %422 = vadd.xlane.f32.xlu0 %v421
  %v423 = vpop.xlane.xlu0 %422
  %v424 = vmul.f32 %v420, %v73
  %v425 = vmul.f32 %v423, %v73
  %v426 = vadd.f32 %v424, 1e-12
  %v427 = vadd.f32 %v425, 1e-12
  %v428 = vrsqrt.pop %v426
  %v429 = vmul.f32 %v428, %v426
  %v430 = vmul.f32 %v429, %v428
  %v431 = vmul.f32 0.5, %v430
  %v432 = vsub.f32 1.5, %v431
  %v433 = vmul.f32 %v428, %v432
  %vm434 = vweird.f32 %v426
  %vm435 = vweird.f32 %v428
  %vm436 = vmor %vm434, %vm435
  %v437 = vsel %vm436, %v428, %v433
  %v438 = vrsqrt.pop %v427
  %v439 = vmul.f32 %v438, %v427
  %v440 = vmul.f32 %v439, %v438
  %v441 = vmul.f32 0.5, %v440
  %v442 = vsub.f32 1.5, %v441
  %v443 = vmul.f32 %v438, %v442
  %vm444 = vweird.f32 %v427
  %vm445 = vweird.f32 %v438
  %vm446 = vmor %vm444, %vm445
  %v447 = vsel %vm446, %v438, %v443
  %v448 = vmul.f32 %v414, %v437
  %v449 = vmul.f32 %v415, %v447
  %v450 = vperm.slane %v140, 1
  %v451 = vmul.f32 %v448, %v450
  %v452 = vmul.f32 %v449, %v450
  %v453 = vperm.slane %v140, 2
  %v454 = vadd.f32 %v451, %v453
  %v455 = vadd.f32 %v452, %v453
  %v457 = vperm.slane %v131, 0
  %v460 = vsel %vm60, %v454, 0
  %v463 = vsel %vm60, %v455, 0
  %465 = vmatpush.msra.mxu0 0.0
  %466 = vmatpush.msra.mxu0 0.0
  %467 = vmatpush.msra.mxu0 0.0
  %468 = vmatpush.msra.mxu0 0.0
  %469 = vmatpush.msra.mxu0 0.0
  %470 = vmatpush.msra.mxu0 0.0
  %471 = vmatpush.msra.mxu0 0.0
  %472 = vmatpush.msra.mxu0 0.0
  %473 = vmatpush.msra.mxu0 0.0
  %474 = vmatpush.msra.mxu0 0.0
  %475 = vmatpush.msra.mxu0 0.0
  %476 = vmatpush.msra.mxu0 0.0
  %477 = vmatpush.msra.mxu0 %v130
  %478 = vmatpush.msra.mxu0 %v129
  %479 = vmatpush.msra.mxu0 %v128
  %480 = vmatpush.msra.mxu0 %v127
  %481 = vmatmul.f32.gmra.mxu0 %v460
  %v482 = vpop.f32.mrf.mxu0
  %v483 = vadd.f32 %v457, %v482
  %484 = vmatmul.f32.gmra.mxu0 %v463
  %v485 = vpop.f32.mrf.mxu0
  %v486 = vadd.f32 %v457, %v485
  %487 = vdwg.mxu0
  %v488 = vmul.f32 %v483, %v483
  %v489 = vmul.f32 %v486, %v486
  %v490 = vmul.f32 %v483, %v488
  %v491 = vmul.f32 %v486, %v489
  %v492 = vmul.f32 %v490, 0.044715
  %v493 = vmul.f32 %v491, 0.044715
  %v494 = vadd.f32 %v483, %v492
  %v495 = vadd.f32 %v486, %v493
  %v496 = vmul.f32 %v494, 0.7978846
  %v497 = vmul.f32 %v495, 0.7978846
  %v498 = vtanh.pop %v496
  %v499 = vtanh.pop %v497
  %v500 = vadd.f32 %v498, 1.0
  %v501 = vadd.f32 %v499, 1.0
  %v502 = vmul.f32 %v500, 0.5
  %v503 = vmul.f32 %v501, 0.5
  %v504 = vmul.f32 %v483, %v502
  %v505 = vmul.f32 %v486, %v503
  %v506 = vperm.slane %v140, 3
  %vm507 = vcmask 523264
  %v509 = vsel %vm507, %v504, 0
  %v512 = vsel %vm507, %v505, 0
  %514 = vmatpush.msra.mxu0 0.0
  %515 = vmatpush.msra.mxu0 0.0
  %516 = vmatpush.msra.mxu0 0.0
  %517 = vmatpush.msra.mxu0 0.0
  %518 = vmatpush.msra.mxu0 0.0
  %519 = vmatpush.msra.mxu0 0.0
  %520 = vmatpush.msra.mxu0 0.0
  %521 = vmatpush.msra.mxu0 0.0
  %522 = vmatpush.msra.mxu0 %v139
  %523 = vmatpush.msra.mxu0 %v138
  %524 = vmatpush.msra.mxu0 %v137
  %525 = vmatpush.msra.mxu0 %v136
  %526 = vmatpush.msra.mxu0 %v135
  %527 = vmatpush.msra.mxu0 %v134
  %528 = vmatpush.msra.mxu0 %v133
  %529 = vmatpush.msra.mxu0 %v132
  %530 = vmatmul.f32.gmra.mxu0 %v509
  %v531 = vpop.f32.mrf.mxu0
  %v532 = vadd.f32 %v506, %v531
  %533 = vmatmul.f32.gmra.mxu0 %v512
  %v534 = vpop.f32.mrf.mxu0
  %v535 = vadd.f32 %v506, %v534
  %536 = vdwg.mxu0
  %v537 = vadd.f32 %v454, %v532
  %v538 = vadd.f32 %v455, %v535
  %v539 = vsel %vm60, %v537, 0.0
  %540 = vadd.xlane.f32.xlu0 %v539
  %v541 = vpop.xlane.xlu0 %540
  %v542 = vsel %vm60, %v538, 0.0
  %543 = vadd.xlane.f32.xlu0 %v542
  %v544 = vpop.xlane.xlu0 %543
  %v545 = vmul.f32 %v541, %v73
  %v546 = vmul.f32 %v544, %v73
  %v547 = vsub.f32 %v537, %v545
  %v548 = vsub.f32 %v538, %v546
  %v549 = vmul.f32 %v547, %v547
  %v550 = vmul.f32 %v548, %v548
  %v551 = vsel %vm60, %v549, 0.0
  %552 = vadd.xlane.f32.xlu0 %v551
  %v553 = vpop.xlane.xlu0 %552
  %v554 = vsel %vm60, %v550, 0.0
  %555 = vadd.xlane.f32.xlu0 %v554
  %v556 = vpop.xlane.xlu0 %555
  %v557 = vmul.f32 %v553, %v73
  %v558 = vmul.f32 %v556, %v73
  %v559 = vadd.f32 %v557, 1e-12
  %v560 = vadd.f32 %v558, 1e-12
  %v561 = vrsqrt.pop %v559
  %v562 = vmul.f32 %v561, %v559
  %v563 = vmul.f32 %v562, %v561
  %v564 = vmul.f32 0.5, %v563
  %v565 = vsub.f32 1.5, %v564
  %v566 = vmul.f32 %v561, %v565
  %vm567 = vweird.f32 %v559
  %vm568 = vweird.f32 %v561
  %vm569 = vmor %vm567, %vm568
  %v570 = vsel %vm569, %v561, %v566
  %v571 = vrsqrt.pop %v560
  %v572 = vmul.f32 %v571, %v560
  %v573 = vmul.f32 %v572, %v571
  %v574 = vmul.f32 0.5, %v573
  %v575 = vsub.f32 1.5, %v574
  %v576 = vmul.f32 %v571, %v575
  %vm577 = vweird.f32 %v560
  %vm578 = vweird.f32 %v571
  %vm579 = vmor %vm577, %vm578
  %v580 = vsel %vm579, %v571, %v576
  %v581 = vmul.f32 %v547, %v570
  %v582 = vmul.f32 %v548, %v580
  %v583 = vperm.slane %v140, 4
  %v584 = vmul.f32 %v581, %v583
  %v585 = vmul.f32 %v582, %v583
  %v586 = vperm.slane %v140, 5
  %v587 = vadd.f32 %v584, %v586
  %v588 = vadd.f32 %v585, %v586
  %s589 = scalar_lea.vmem %s3, 32
  %v590 = vld [vmem:[%s589] sm:$0xff]
  %v591 = vld [vmem:[%s589 + $0x8] sm:$0xff]
  %v592 = vld [vmem:[%s589 + $0x10] sm:$0xff]
  %v593 = vld [vmem:[%s589 + $0x18] sm:$0xff]
  %s594 = scalar_lea.vmem %s4, 1
  %v595 = vld [vmem:[%s594] sm:$0x1]
  %s596 = scalar_lea.vmem %s5, 32
  %v597 = vld [vmem:[%s596] sm:$0xff]
  %v598 = vld [vmem:[%s596 + $0x8] sm:$0xff]
  %v599 = vld [vmem:[%s596 + $0x10] sm:$0xff]
  %v600 = vld [vmem:[%s596 + $0x18] sm:$0xff]
  %s601 = scalar_lea.vmem %s6, 32
  %v602 = vld [vmem:[%s601] sm:$0xff]
  %v603 = vld [vmem:[%s601 + $0x8] sm:$0xff]
  %v604 = vld [vmem:[%s601 + $0x10] sm:$0xff]
  %v605 = vld [vmem:[%s601 + $0x18] sm:$0xff]
  %s606 = scalar_lea.vmem %s7, 1
  %v607 = vld [vmem:[%s606] sm:$0x1]
  %s608 = scalar_lea.vmem %s8, 64
  %v609 = vld [vmem:[%s608] sm:$0xff]
  %v610 = vld [vmem:[%s608 + $0x8] sm:$0xff]
  %v611 = vld [vmem:[%s608 + $0x10] sm:$0xff]
  %v612 = vld [vmem:[%s608 + $0x18] sm:$0xff]
  %v613 = vld [vmem:[%s608 + $0x20] sm:$0xff]
  %v614 = vld [vmem:[%s608 + $0x28] sm:$0xff]
  %v615 = vld [vmem:[%s608 + $0x30] sm:$0xff]
  %v616 = vld [vmem:[%s608 + $0x38] sm:$0xff]
  %s617 = scalar_lea.vmem %s9, 8
  %v618 = vld [vmem:[%s617] sm:$0x3f]
  %v620 = vperm.slane %v595, 0
  %v623 = vsel %vm60, %v587, 0
  %v626 = vsel %vm60, %v588, 0
  %628 = vmatpush.msra.mxu0 0.0
  %629 = vmatpush.msra.mxu0 0.0
  %630 = vmatpush.msra.mxu0 0.0
  %631 = vmatpush.msra.mxu0 0.0
  %632 = vmatpush.msra.mxu0 0.0
  %633 = vmatpush.msra.mxu0 0.0
  %634 = vmatpush.msra.mxu0 0.0
  %635 = vmatpush.msra.mxu0 0.0
  %636 = vmatpush.msra.mxu0 0.0
  %637 = vmatpush.msra.mxu0 0.0
  %638 = vmatpush.msra.mxu0 0.0
  %639 = vmatpush.msra.mxu0 0.0
  %640 = vmatpush.msra.mxu0 %v593
  %641 = vmatpush.msra.mxu0 %v592
  %642 = vmatpush.msra.mxu0 %v591
  %643 = vmatpush.msra.mxu0 %v590
  %644 = vmatmul.f32.gmra.mxu0 %v623
  %v645 = vpop.f32.mrf.mxu0
  %v646 = vadd.f32 %v620, %v645
  %647 = vmatmul.f32.gmra.mxu0 %v626
  %v648 = vpop.f32.mrf.mxu0
  %v649 = vadd.f32 %v620, %v648
  %650 = vdwg.mxu0
  %653 = vrot.lane.b32.xlu0 %v646, 96
  %v654 = vpop.permute.xlu0 %653
  %655 = vrot.lane.b32.xlu0 %v649, 96
  %v656 = vpop.permute.xlu0 %655
  %v657 = vsel %vm179, %v646, 0
  %v659 = vsel %vm179, %v649, 0
  %v661 = vsel %vm179, %v654, 0
  %v663 = vsel %vm179, %v656, 0
  %665 = vmatpush.xpose.msra.mxu0 0.0
  %666 = vmatpush.xpose.msra.mxu0 0.0
  %667 = vmatpush.xpose.msra.mxu0 0.0
  %668 = vmatpush.xpose.msra.mxu0 0.0
  %669 = vmatpush.xpose.msra.mxu0 0.0
  %670 = vmatpush.xpose.msra.mxu0 0.0
  %671 = vmatpush.xpose.msra.mxu0 0.0
  %672 = vmatpush.xpose.msra.mxu0 0.0
  %673 = vmatpush.xpose.msra.mxu0 0.0
  %674 = vmatpush.xpose.msra.mxu0 0.0
  %675 = vmatpush.xpose.msra.mxu0 0.0
  %676 = vmatpush.xpose.msra.mxu0 0.0
  %677 = vmatpush.xpose.msra.mxu0 0.0
  %678 = vmatpush.xpose.msra.mxu0 0.0
  %679 = vmatpush.xpose.msra.mxu0 %v663
  %680 = vmatpush.xpose.msra.mxu0 %v661
  %681 = vmatmul.f32.gmra.mxu0 %v657
  %v682 = vpop.f32.mrf.mxu0
  %v683 = vadd.f32 %v57, %v682
  %684 = vmatmul.f32.gmra.mxu0 %v659
  %v685 = vpop.f32.mrf.mxu0
  %v686 = vadd.f32 %v58, %v685
  %687 = vdwg.mxu0
  %v688 = vsel %vm179, %v683, -inf
  %689 = vmax.xlane.f32.xlu0 %v688
  %v690 = vpop.xlane.xlu0 %689
  %v691 = vsel %vm179, %v686, -inf
  %692 = vmax.xlane.f32.xlu0 %v691
  %v693 = vpop.xlane.xlu0 %692
  %v694 = vsub.f32 %v683, %v690
  %v695 = vsub.f32 %v686, %v693
  %v696 = vmul.f32 %v694, 1.442695
  %v697 = vpow.pop %v696
  %v698 = vmul.f32 %v695, 1.442695
  %v699 = vpow.pop %v698
  %v700 = vsel %vm179, %v697, 0.0
  %701 = vadd.xlane.f32.xlu0 %v700
  %v702 = vpop.xlane.xlu0 %701
  %v703 = vsel %vm179, %v699, 0.0
  %704 = vadd.xlane.f32.xlu0 %v703
  %v705 = vpop.xlane.xlu0 %704
  %v706 = vrcp.pop %v702
  %v707 = vrcp.pop %v705
  %v708 = vmul.f32 %v697, %v706
  %v709 = vmul.f32 %v699, %v707
  %710 = vrot.lane.b32.xlu0 %v646, 64
  %v711 = vpop.permute.xlu0 %710
  %712 = vrot.lane.b32.xlu0 %v649, 64
  %v713 = vpop.permute.xlu0 %712
  %v717 = vsel %vm179, %v708, 0
  %v720 = vsel %vm179, %v709, 0
  %722 = vmatpush.msra.mxu0 0.0
  %723 = vmatpush.msra.mxu0 0.0
  %724 = vmatpush.msra.mxu0 0.0
  %725 = vmatpush.msra.mxu0 0.0
  %726 = vmatpush.msra.mxu0 0.0
  %727 = vmatpush.msra.mxu0 0.0
  %728 = vmatpush.msra.mxu0 0.0
  %729 = vmatpush.msra.mxu0 0.0
  %730 = vmatpush.msra.mxu0 0.0
  %731 = vmatpush.msra.mxu0 0.0
  %732 = vmatpush.msra.mxu0 0.0
  %733 = vmatpush.msra.mxu0 0.0
  %734 = vmatpush.msra.mxu0 0.0
  %735 = vmatpush.msra.mxu0 0.0
  %736 = vmatpush.msra.mxu0 %v713
  %737 = vmatpush.msra.mxu0 %v711
  %738 = vmatmul.f32.gmra.mxu0 %v717
  %v739 = vpop.f32.mrf.mxu0
  %v740 = vadd.f32 0.0, %v739
  %741 = vmatmul.f32.gmra.mxu0 %v720
  %v742 = vpop.f32.mrf.mxu0
  %v743 = vadd.f32 0.0, %v742
  %744 = vdwg.mxu0
  %745 = vrot.lane.b32.xlu0 %v646, 112
  %v746 = vpop.permute.xlu0 %745
  %747 = vrot.lane.b32.xlu0 %v649, 112
  %v748 = vpop.permute.xlu0 %747
  %749 = vrot.lane.b32.xlu0 %v646, 80
  %v750 = vpop.permute.xlu0 %749
  %751 = vrot.lane.b32.xlu0 %v649, 80
  %v752 = vpop.permute.xlu0 %751
  %v753 = vsel %vm179, %v746, 0
  %v755 = vsel %vm179, %v748, 0
  %v757 = vsel %vm179, %v750, 0
  %v759 = vsel %vm179, %v752, 0
  %761 = vmatpush.xpose.msra.mxu0 0.0
  %762 = vmatpush.xpose.msra.mxu0 0.0
  %763 = vmatpush.xpose.msra.mxu0 0.0
  %764 = vmatpush.xpose.msra.mxu0 0.0
  %765 = vmatpush.xpose.msra.mxu0 0.0
  %766 = vmatpush.xpose.msra.mxu0 0.0
  %767 = vmatpush.xpose.msra.mxu0 0.0
  %768 = vmatpush.xpose.msra.mxu0 0.0
  %769 = vmatpush.xpose.msra.mxu0 0.0
  %770 = vmatpush.xpose.msra.mxu0 0.0
  %771 = vmatpush.xpose.msra.mxu0 0.0
  %772 = vmatpush.xpose.msra.mxu0 0.0
  %773 = vmatpush.xpose.msra.mxu0 0.0
  %774 = vmatpush.xpose.msra.mxu0 0.0
  %775 = vmatpush.xpose.msra.mxu0 %v759
  %776 = vmatpush.xpose.msra.mxu0 %v757
  %777 = vmatmul.f32.gmra.mxu0 %v753
  %v778 = vpop.f32.mrf.mxu0
  %v779 = vadd.f32 %v57, %v778
  %780 = vmatmul.f32.gmra.mxu0 %v755
  %v781 = vpop.f32.mrf.mxu0
  %v782 = vadd.f32 %v58, %v781
  %783 = vdwg.mxu0
  %v784 = vsel %vm179, %v779, -inf
  %785 = vmax.xlane.f32.xlu0 %v784
  %v786 = vpop.xlane.xlu0 %785
  %v787 = vsel %vm179, %v782, -inf
  %788 = vmax.xlane.f32.xlu0 %v787
  %v789 = vpop.xlane.xlu0 %788
  %v790 = vsub.f32 %v779, %v786
  %v791 = vsub.f32 %v782, %v789
  %v792 = vmul.f32 %v790, 1.442695
  %v793 = vpow.pop %v792
  %v794 = vmul.f32 %v791, 1.442695
  %v795 = vpow.pop %v794
  %v796 = vsel %vm179, %v793, 0.0
  %797 = vadd.xlane.f32.xlu0 %v796
  %v798 = vpop.xlane.xlu0 %797
  %v799 = vsel %vm179, %v795, 0.0
  %800 = vadd.xlane.f32.xlu0 %v799
  %v801 = vpop.xlane.xlu0 %800
  %v802 = vrcp.pop %v798
  %v803 = vrcp.pop %v801
  %v804 = vmul.f32 %v793, %v802
  %v805 = vmul.f32 %v795, %v803
  %806 = vrot.lane.b32.xlu0 %v646, 48
  %v807 = vpop.permute.xlu0 %806
  %808 = vrot.lane.b32.xlu0 %v649, 48
  %v809 = vpop.permute.xlu0 %808
  %v813 = vsel %vm179, %v804, 0
  %v816 = vsel %vm179, %v805, 0
  %818 = vmatpush.msra.mxu0 0.0
  %819 = vmatpush.msra.mxu0 0.0
  %820 = vmatpush.msra.mxu0 0.0
  %821 = vmatpush.msra.mxu0 0.0
  %822 = vmatpush.msra.mxu0 0.0
  %823 = vmatpush.msra.mxu0 0.0
  %824 = vmatpush.msra.mxu0 0.0
  %825 = vmatpush.msra.mxu0 0.0
  %826 = vmatpush.msra.mxu0 0.0
  %827 = vmatpush.msra.mxu0 0.0
  %828 = vmatpush.msra.mxu0 0.0
  %829 = vmatpush.msra.mxu0 0.0
  %830 = vmatpush.msra.mxu0 0.0
  %831 = vmatpush.msra.mxu0 0.0
  %832 = vmatpush.msra.mxu0 %v809
  %833 = vmatpush.msra.mxu0 %v807
  %834 = vmatmul.f32.gmra.mxu0 %v813
  %v835 = vpop.f32.mrf.mxu0
  %v836 = vadd.f32 0.0, %v835
  %837 = vmatmul.f32.gmra.mxu0 %v816
  %v838 = vpop.f32.mrf.mxu0
  %v839 = vadd.f32 0.0, %v838
  %840 = vdwg.mxu0
  %843 = vrot.lane.b32.xlu0 %v836, 16
  %v844 = vpop.permute.xlu0 %843
  %845 = vrot.lane.b32.xlu0 %v839, 16
  %v846 = vpop.permute.xlu0 %845
  %v849 = vsel %vm179, %v740, %v844
  %v850 = vsel %vm179, %v743, %v846
  %v851 = vperm.slane %v618, 0
  %v853 = vsel %vm60, %v849, 0
  %v856 = vsel %vm60, %v850, 0
  %858 = vmatpush.msra.mxu0 0.0
  %859 = vmatpush.msra.mxu0 0.0
  %860 = vmatpush.msra.mxu0 0.0
  %861 = vmatpush.msra.mxu0 0.0
  %862 = vmatpush.msra.mxu0 0.0
  %863 = vmatpush.msra.mxu0 0.0
  %864 = vmatpush.msra.mxu0 0.0
  %865 = vmatpush.msra.mxu0 0.0
  %866 = vmatpush.msra.mxu0 0.0
  %867 = vmatpush.msra.mxu0 0.0
  %868 = vmatpush.msra.mxu0 0.0
  %869 = vmatpush.msra.mxu0 0.0
  %870 = vmatpush.msra.mxu0 %v600
  %871 = vmatpush.msra.mxu0 %v599
  %872 = vmatpush.msra.mxu0 %v598
  %873 = vmatpush.msra.mxu0 %v597
  %874 = vmatmul.f32.gmra.mxu0 %v853
  %v875 = vpop.f32.mrf.mxu0
  %v876 = vadd.f32 %v851, %v875
  %877 = vmatmul.f32.gmra.mxu0 %v856
  %v878 = vpop.f32.mrf.mxu0
  %v879 = vadd.f32 %v851, %v878
  %880 = vdwg.mxu0
  %v881 = vadd.f32 %v587, %v876
  %v882 = vadd.f32 %v588, %v879
  %v883 = vsel %vm60, %v881, 0.0
  %884 = vadd.xlane.f32.xlu0 %v883
  %v885 = vpop.xlane.xlu0 %884
  %v886 = vsel %vm60, %v882, 0.0
  %887 = vadd.xlane.f32.xlu0 %v886
  %v888 = vpop.xlane.xlu0 %887
  %v889 = vmul.f32 %v885, %v73
  %v890 = vmul.f32 %v888, %v73
  %v891 = vsub.f32 %v881, %v889
  %v892 = vsub.f32 %v882, %v890
  %v893 = vmul.f32 %v891, %v891
  %v894 = vmul.f32 %v892, %v892
  %v895 = vsel %vm60, %v893, 0.0
  %896 = vadd.xlane.f32.xlu0 %v895
  %v897 = vpop.xlane.xlu0 %896
  %v898 = vsel %vm60, %v894, 0.0
  %899 = vadd.xlane.f32.xlu0 %v898
  %v900 = vpop.xlane.xlu0 %899
  %v901 = vmul.f32 %v897, %v73
  %v902 = vmul.f32 %v900, %v73
  %v903 = vadd.f32 %v901, 1e-12
  %v904 = vadd.f32 %v902, 1e-12
  %v905 = vrsqrt.pop %v903
  %v906 = vmul.f32 %v905, %v903
  %v907 = vmul.f32 %v906, %v905
  %v908 = vmul.f32 0.5, %v907
  %v909 = vsub.f32 1.5, %v908
  %v910 = vmul.f32 %v905, %v909
  %vm911 = vweird.f32 %v903
  %vm912 = vweird.f32 %v905
  %vm913 = vmor %vm911, %vm912
  %v914 = vsel %vm913, %v905, %v910
  %v915 = vrsqrt.pop %v904
  %v916 = vmul.f32 %v915, %v904
  %v917 = vmul.f32 %v916, %v915
  %v918 = vmul.f32 0.5, %v917
  %v919 = vsub.f32 1.5, %v918
  %v920 = vmul.f32 %v915, %v919
  %vm921 = vweird.f32 %v904
  %vm922 = vweird.f32 %v915
  %vm923 = vmor %vm921, %vm922
  %v924 = vsel %vm923, %v915, %v920
  %v925 = vmul.f32 %v891, %v914
  %v926 = vmul.f32 %v892, %v924
  %v927 = vperm.slane %v618, 1
  %v928 = vmul.f32 %v925, %v927
  %v929 = vmul.f32 %v926, %v927
  %v930 = vperm.slane %v618, 2
  %v931 = vadd.f32 %v928, %v930
  %v932 = vadd.f32 %v929, %v930
  %v934 = vperm.slane %v607, 0
  %v937 = vsel %vm60, %v931, 0
  %v940 = vsel %vm60, %v932, 0
  %942 = vmatpush.msra.mxu0 0.0
  %943 = vmatpush.msra.mxu0 0.0
  %944 = vmatpush.msra.mxu0 0.0
  %945 = vmatpush.msra.mxu0 0.0
  %946 = vmatpush.msra.mxu0 0.0
  %947 = vmatpush.msra.mxu0 0.0
  %948 = vmatpush.msra.mxu0 0.0
  %949 = vmatpush.msra.mxu0 0.0
  %950 = vmatpush.msra.mxu0 0.0
  %951 = vmatpush.msra.mxu0 0.0
  %952 = vmatpush.msra.mxu0 0.0
  %953 = vmatpush.msra.mxu0 0.0
  %954 = vmatpush.msra.mxu0 %v605
  %955 = vmatpush.msra.mxu0 %v604
  %956 = vmatpush.msra.mxu0 %v603
  %957 = vmatpush.msra.mxu0 %v602
  %958 = vmatmul.f32.gmra.mxu0 %v937
  %v959 = vpop.f32.mrf.mxu0
  %v960 = vadd.f32 %v934, %v959
  %961 = vmatmul.f32.gmra.mxu0 %v940
  %v962 = vpop.f32.mrf.mxu0
  %v963 = vadd.f32 %v934, %v962
  %964 = vdwg.mxu0
  %v965 = vmul.f32 %v960, %v960
  %v966 = vmul.f32 %v963, %v963
  %v967 = vmul.f32 %v960, %v965
  %v968 = vmul.f32 %v963, %v966
  %v969 = vmul.f32 %v967, 0.044715
  %v970 = vmul.f32 %v968, 0.044715
  %v971 = vadd.f32 %v960, %v969
  %v972 = vadd.f32 %v963, %v970
  %v973 = vmul.f32 %v971, 0.7978846
  %v974 = vmul.f32 %v972, 0.7978846
  %v975 = vtanh.pop %v973
  %v976 = vtanh.pop %v974
  %v977 = vadd.f32 %v975, 1.0
  %v978 = vadd.f32 %v976, 1.0
  %v979 = vmul.f32 %v977, 0.5
  %v980 = vmul.f32 %v978, 0.5
  %v981 = vmul.f32 %v960, %v979
  %v982 = vmul.f32 %v963, %v980
  %v983 = vperm.slane %v618, 3
  %v985 = vsel %vm507, %v981, 0
  %v988 = vsel %vm507, %v982, 0
  %990 = vmatpush.msra.mxu0 0.0
  %991 = vmatpush.msra.mxu0 0.0
  %992 = vmatpush.msra.mxu0 0.0
  %993 = vmatpush.msra.mxu0 0.0
  %994 = vmatpush.msra.mxu0 0.0
  %995 = vmatpush.msra.mxu0 0.0
  %996 = vmatpush.msra.mxu0 0.0
  %997 = vmatpush.msra.mxu0 0.0
  %998 = vmatpush.msra.mxu0 %v616
  %999 = vmatpush.msra.mxu0 %v615
  %1000 = vmatpush.msra.mxu0 %v614
  %1001 = vmatpush.msra.mxu0 %v613
  %1002 = vmatpush.msra.mxu0 %v612
  %1003 = vmatpush.msra.mxu0 %v611
  %1004 = vmatpush.msra.mxu0 %v610
  %1005 = vmatpush.msra.mxu0 %v609
  %1006 = vmatmul.f32.gmra.mxu0 %v985
  %v1007 = vpop.f32.mrf.mxu0
  %v1008 = vadd.f32 %v983, %v1007
  %1009 = vmatmul.f32.gmra.mxu0 %v988
  %v1010 = vpop.f32.mrf.mxu0
  %v1011 = vadd.f32 %v983, %v1010
  %1012 = vdwg.mxu0
  %v1013 = vadd.f32 %v931, %v1008
  %v1014 = vadd.f32 %v932, %v1011
  %v1015 = vsel %vm60, %v1013, 0.0
  %1016 = vadd.xlane.f32.xlu0 %v1015
  %v1017 = vpop.xlane.xlu0 %1016
  %v1018 = vsel %vm60, %v1014, 0.0
  %1019 = vadd.xlane.f32.xlu0 %v1018
  %v1020 = vpop.xlane.xlu0 %1019
  %v1021 = vmul.f32 %v1017, %v73
  %v1022 = vmul.f32 %v1020, %v73
  %v1023 = vsub.f32 %v1013, %v1021
  %v1024 = vsub.f32 %v1014, %v1022
  %v1025 = vmul.f32 %v1023, %v1023
  %v1026 = vmul.f32 %v1024, %v1024
  %v1027 = vsel %vm60, %v1025, 0.0
  %1028 = vadd.xlane.f32.xlu0 %v1027
  %v1029 = vpop.xlane.xlu0 %1028
  %v1030 = vsel %vm60, %v1026, 0.0
  %1031 = vadd.xlane.f32.xlu0 %v1030
  %v1032 = vpop.xlane.xlu0 %1031
  %v1033 = vmul.f32 %v1029, %v73
  %v1034 = vmul.f32 %v1032, %v73
  %v1035 = vadd.f32 %v1033, 1e-12
  %v1036 = vadd.f32 %v1034, 1e-12
  %v1037 = vrsqrt.pop %v1035
  %v1038 = vmul.f32 %v1037, %v1035
  %v1039 = vmul.f32 %v1038, %v1037
  %v1040 = vmul.f32 0.5, %v1039
  %v1041 = vsub.f32 1.5, %v1040
  %v1042 = vmul.f32 %v1037, %v1041
  %vm1043 = vweird.f32 %v1035
  %vm1044 = vweird.f32 %v1037
  %vm1045 = vmor %vm1043, %vm1044
  %v1046 = vsel %vm1045, %v1037, %v1042
  %v1047 = vrsqrt.pop %v1036
  %v1048 = vmul.f32 %v1047, %v1036
  %v1049 = vmul.f32 %v1048, %v1047
  %v1050 = vmul.f32 0.5, %v1049
  %v1051 = vsub.f32 1.5, %v1050
  %v1052 = vmul.f32 %v1047, %v1051
  %vm1053 = vweird.f32 %v1036
  %vm1054 = vweird.f32 %v1047
  %vm1055 = vmor %vm1053, %vm1054
  %v1056 = vsel %vm1055, %v1047, %v1052
  %v1057 = vmul.f32 %v1023, %v1046
  %v1058 = vmul.f32 %v1024, %v1056
  %v1059 = vperm.slane %v618, 4
  %v1060 = vmul.f32 %v1057, %v1059
  %v1061 = vmul.f32 %v1058, %v1059
  %v1062 = vperm.slane %v618, 5
  %v1063 = vadd.f32 %v1060, %v1062
  %v1064 = vadd.f32 %v1061, %v1062
  %v1065 = vld [vmem:[%s10] sm:$0xff]
  %v1066 = vld [vmem:[%s10 + $0x8] sm:$0xff]
  %v1067 = vld [vmem:[%s10 + $0x10] sm:$0xff]
  %v1068 = vld [vmem:[%s10 + $0x18] sm:$0xff]
  %v1069 = vld [vmem:[%s11] sm:$0x1]
  %v1071 = vperm.slane %v1069, 0
  %v1074 = vsel %vm60, %v1063, 0
  %v1077 = vsel %vm60, %v1064, 0
  %1079 = vmatpush.msra.mxu0 0.0
  %1080 = vmatpush.msra.mxu0 0.0
  %1081 = vmatpush.msra.mxu0 0.0
  %1082 = vmatpush.msra.mxu0 0.0
  %1083 = vmatpush.msra.mxu0 0.0
  %1084 = vmatpush.msra.mxu0 0.0
  %1085 = vmatpush.msra.mxu0 0.0
  %1086 = vmatpush.msra.mxu0 0.0
  %1087 = vmatpush.msra.mxu0 0.0
  %1088 = vmatpush.msra.mxu0 0.0
  %1089 = vmatpush.msra.mxu0 0.0
  %1090 = vmatpush.msra.mxu0 0.0
  %1091 = vmatpush.msra.mxu0 %v1068
  %1092 = vmatpush.msra.mxu0 %v1067
  %1093 = vmatpush.msra.mxu0 %v1066
  %1094 = vmatpush.msra.mxu0 %v1065
  %1095 = vmatmul.f32.gmra.mxu0 %v1074
  %v1096 = vpop.f32.mrf.mxu0
  %v1097 = vadd.f32 %v1071, %v1096
  %1098 = vmatmul.f32.gmra.mxu0 %v1077
  %v1099 = vpop.f32.mrf.mxu0
  %v1100 = vadd.f32 %v1071, %v1099
  %1101 = vdwg.mxu0
  %1102 = vst [vmem:[%s16] sm:$0xff] %v1097
  %1103 = vst [vmem:[%s16 + $0x8] sm:$0xff] %v1100
  %vm1104 = vcmask 64512
  %v1105 = vsel %vm1104, %v1097, -inf
  %1106 = vmax.xlane.f32.xlu0 %v1105
  %v1107 = vpop.xlane.xlu0 %1106
  %v1108 = vsel %vm1104, %v1100, -inf
  %1109 = vmax.xlane.f32.xlu0 %v1108
  %v1110 = vpop.xlane.xlu0 %1109
  %v1111 = vsub.f32 %v1097, %v1107
  %v1112 = vsub.f32 %v1100, %v1110
  %v1113 = vmul.f32 %v1111, 1.442695
  %v1114 = vpow.pop %v1113
  %v1115 = vmul.f32 %v1112, 1.442695
  %v1116 = vpow.pop %v1115
  %v1117 = vsel %vm1104, %v1114, 0.0
  %1118 = vadd.xlane.f32.xlu0 %v1117
  %v1119 = vpop.xlane.xlu0 %1118
  %v1120 = vsel %vm1104, %v1116, 0.0
  %1121 = vadd.xlane.f32.xlu0 %v1120
  %v1122 = vpop.xlane.xlu0 %1121
  %v1123 = vrcp.pop %v1119
  %v1124 = vrcp.pop %v1122
  %v1125 = vmul.f32 %v1114, %v1123
  %v1126 = vmul.f32 %v1116, %v1124
  %1129 = vrot.lane.b32.xlu0 %v1125, 32
  %v1130 = vpop.permute.xlu0 %1129
  %1131 = vrot.lane.b32.xlu0 %v1126, 32
  %v1132 = vpop.permute.xlu0 %1131
  %v1135 = vsel %vm60, %v1063, %v1130
  %v1136 = vsel %vm60, %v1064, %v1132
  %v1137 = vld [vmem:[%s13] sm:$0x7]
  %v1138 = vld [vmem:[%s12] sm:$0xff]
  %v1139 = vld [vmem:[%s12 + $0x8] sm:$0xff]
  %v1140 = vld [vmem:[%s12 + $0x10] sm:$0xff]
  %v1141 = vld [vmem:[%s12 + $0x18] sm:$0xff]
  %v1142 = vld [vmem:[%s12 + $0x20] sm:$0xff]
  %v1143 = vperm.slane %v1137, 0
  %vm1144 = vcmask 326656
  %v1146 = vsel %vm1144, %v1135, 0
  %v1149 = vsel %vm1144, %v1136, 0
  %1151 = vmatpush.msra.mxu0 0.0
  %1152 = vmatpush.msra.mxu0 0.0
  %1153 = vmatpush.msra.mxu0 0.0
  %1154 = vmatpush.msra.mxu0 0.0
  %1155 = vmatpush.msra.mxu0 0.0
  %1156 = vmatpush.msra.mxu0 0.0
  %1157 = vmatpush.msra.mxu0 0.0
  %1158 = vmatpush.msra.mxu0 0.0
  %1159 = vmatpush.msra.mxu0 0.0
  %1160 = vmatpush.msra.mxu0 0.0
  %1161 = vmatpush.msra.mxu0 0.0
  %1162 = vmatpush.msra.mxu0 %v1142
  %1163 = vmatpush.msra.mxu0 %v1141
  %1164 = vmatpush.msra.mxu0 %v1140
  %1165 = vmatpush.msra.mxu0 %v1139
  %1166 = vmatpush.msra.mxu0 %v1138
  %1167 = vmatmul.f32.gmra.mxu0 %v1146
  %v1168 = vpop.f32.mrf.mxu0
  %v1169 = vadd.f32 %v1143, %v1168
  %1170 = vmatmul.f32.gmra.mxu0 %v1149
  %v1171 = vpop.f32.mrf.mxu0
  %v1172 = vadd.f32 %v1143, %v1171
  %1173 = vdwg.mxu0
  %v1174 = vtanh.pop %v1169
  %v1175 = vtanh.pop %v1172
  %v1176 = vsel %vm1144, %v1174, 0.0
  %1177 = vadd.xlane.f32.xlu0 %v1176
  %v1178 = vpop.xlane.xlu0 %1177
  %v1179 = vsel %vm1144, %v1175, 0.0
  %1180 = vadd.xlane.f32.xlu0 %v1179
  %v1181 = vpop.xlane.xlu0 %1180
  %v1182 = vrcp.pop 40.0
  %v1183 = vmul.f32 40.0, %v1182
  %v1184 = vsub.f32 1.0, %v1183
  %v1185 = vmul.f32 %v1182, %v1184
  %v1186 = vadd.f32 %v1182, %v1185
  %vm1187 = vweird.f32 %v1182
  %v1188 = vsel %vm1187, %v1182, %v1186
  %v1189 = vmul.f32 %v1178, %v1188
  %v1190 = vmul.f32 %v1181, %v1188
  %v1191 = vsub.f32 %v1174, %v1189
  %v1192 = vsub.f32 %v1175, %v1190
  %v1193 = vmul.f32 %v1191, %v1191
  %v1194 = vmul.f32 %v1192, %v1192
  %v1195 = vsel %vm1144, %v1193, 0.0
  %1196 = vadd.xlane.f32.xlu0 %v1195
  %v1197 = vpop.xlane.xlu0 %1196
  %v1198 = vsel %vm1144, %v1194, 0.0
  %1199 = vadd.xlane.f32.xlu0 %v1198
  %v1200 = vpop.xlane.xlu0 %1199
  %v1201 = vmul.f32 %v1197, %v1188
  %v1202 = vmul.f32 %v1200, %v1188
  %v1203 = vadd.f32 %v1201, 1e-12
  %v1204 = vadd.f32 %v1202, 1e-12
  %v1205 = vrsqrt.pop %v1203
  %v1206 = vmul.f32 %v1205, %v1203
  %v1207 = vmul.f32 %v1206, %v1205
  %v1208 = vmul.f32 0.5, %v1207
  %v1209 = vsub.f32 1.5, %v1208
  %v1210 = vmul.f32 %v1205, %v1209
  %vm1211 = vweird.f32 %v1203
  %vm1212 = vweird.f32 %v1205
  %vm1213 = vmor %vm1211, %vm1212
  %v1214 = vsel %vm1213, %v1205, %v1210
  %v1215 = vrsqrt.pop %v1204
  %v1216 = vmul.f32 %v1215, %v1204
  %v1217 = vmul.f32 %v1216, %v1215
  %v1218 = vmul.f32 0.5, %v1217
  %v1219 = vsub.f32 1.5, %v1218
  %v1220 = vmul.f32 %v1215, %v1219
  %vm1221 = vweird.f32 %v1204
  %vm1222 = vweird.f32 %v1215
  %vm1223 = vmor %vm1221, %vm1222
  %v1224 = vsel %vm1223, %v1215, %v1220
  %v1225 = vmul.f32 %v1191, %v1214
  %v1226 = vmul.f32 %v1192, %v1224
  %v1227 = vperm.slane %v1137, 1
  %v1228 = vmul.f32 %v1225, %v1227
  %v1229 = vmul.f32 %v1226, %v1227
  %v1230 = vperm.slane %v1137, 2
  %v1231 = vadd.f32 %v1228, %v1230
  %v1232 = vadd.f32 %v1229, %v1230
  %v1233 = vld [vmem:[%s14] sm:$0xff]
  %v1234 = vld [vmem:[%s14 + $0x8] sm:$0xff]
  %v1235 = vld [vmem:[%s14 + $0x10] sm:$0xff]
  %v1236 = vld [vmem:[%s14 + $0x18] sm:$0xff]
  %v1237 = vld [vmem:[%s14 + $0x20] sm:$0xff]
  %v1238 = vld [vmem:[%s15] sm:$0x1]
  %v1240 = vperm.slane %v1238, 0
  %v1243 = vsel %vm1144, %v1231, 0
  %v1246 = vsel %vm1144, %v1232, 0
  %1248 = vmatpush.msra.mxu0 0.0
  %1249 = vmatpush.msra.mxu0 0.0
  %1250 = vmatpush.msra.mxu0 0.0
  %1251 = vmatpush.msra.mxu0 0.0
  %1252 = vmatpush.msra.mxu0 0.0
  %1253 = vmatpush.msra.mxu0 0.0
  %1254 = vmatpush.msra.mxu0 0.0
  %1255 = vmatpush.msra.mxu0 0.0
  %1256 = vmatpush.msra.mxu0 0.0
  %1257 = vmatpush.msra.mxu0 0.0
  %1258 = vmatpush.msra.mxu0 0.0
  %1259 = vmatpush.msra.mxu0 %v1237
  %1260 = vmatpush.msra.mxu0 %v1236
  %1261 = vmatpush.msra.mxu0 %v1235
  %1262 = vmatpush.msra.mxu0 %v1234
  %1263 = vmatpush.msra.mxu0 %v1233
  %1264 = vmatmul.f32.gmra.mxu0 %v1243
  %v1265 = vpop.f32.mrf.mxu0
  %v1266 = vadd.f32 %v1240, %v1265
  %1267 = vmatmul.f32.gmra.mxu0 %v1246
  %v1268 = vpop.f32.mrf.mxu0
  %v1269 = vadd.f32 %v1240, %v1268
  %1270 = vdwg.mxu0
  %1271 = vst [vmem:[%s17] sm:$0xff] %v1266
  %1272 = vst [vmem:[%s17 + $0x8] sm:$0xff] %v1269
  // Predicated region
  $region66: #{bert_span_for_ner_forward.1} parent=0 // pred_check
    _
  $region67: #{bert_span_for_ner_forward.1} parent=0 // pred_check_branch
    %1274 = sbr.rel (0) target = $region69
  $region68: #{bert_span_for_ner_forward.1} parent=0 // pred_region
    _
  $region69: #{bert_span_for_ner_forward.1} parent=0 // pred_fallthru
    _
  // Predicated region
  $region70: #{bert_span_for_ner_forward.1} parent=0 // pred_check
    _
  $region71: #{bert_span_for_ner_forward.1} parent=0 // pred_check_branch
    %1276 = sbr.rel (0) target = $region73
  $region72: #{bert_span_for_ner_forward.1} parent=0 // pred_region
    _
  $region73: #{bert_span_for_ner_forward.1} parent=0 // pred_fallthru
    _
  // Predicated region
  $region74: #{bert_span_for_ner_forward.1} parent=0 // pred_check
    _
  $region75: #{bert_span_for_ner_forward.1} parent=0 // pred_check_branch
    %1278 = sbr.rel (0) target = $region77
  $region76: #{bert_span_for_ner_forward.1} parent=0 // pred_region
    _
  $region77: #{bert_span_for_ner_forward.1} parent=0 // pred_fallthru
    _
  // Predicated region
  $region78: #{bert_span_for_ner_forward.1} parent=0 // pred_check
    _
  $region79: #{bert_span_for_ner_forward.1} parent=0 // pred_check_branch
    %1280 = sbr.rel (0) target = $region81
  $region80: #{bert_span_for_ner_forward.1} parent=0 // pred_region
    _
  $region81: #{bert_span_for_ner_forward.1} parent=0 // pred_fallthru
    _

</llo_original>
